<compile_context>
chip_gen: v5e
topology: v5e:2x2
jax: 0.10.0
libtpu: 0.0.40
codegen_flags: <defaults>
</compile_context>

<pallas_src>
import jax
import jax.numpy as jnp
from jax.experimental import pallas as pl
from jax.experimental.pallas import tpu as pltpu
import numpy as np

HID = 256  # fusion_layer hidden width


# --------------------------------------------------------------------------- kernel

def fusion_kernel(fv_ref, fl_ref, wbig_ref, bbig_ref, wf2_ref, bf2_ref, o_ref):
    xv = fv_ref[...]                                   # (TB, S, D) f32
    xl = fl_ref[...]
    S = xv.shape[1]
    inv_s = 1.0 / S                                    # static; applied in f32 pre-cast

    # Column sums over the length axis (the only full reductions needed).
    tv = jnp.sum(xv, axis=1)                           # (TB, D)
    tl = jnp.sum(xl, axis=1)                           # (TB, D)

    # Edge rows as two contiguous 2-row slabs per input (fewer strided extractions).
    head_v = xv[:, 0:2, :]
    head_l = xl[:, 0:2, :]
    tail_v = xv[:, S - 2:S, :]
    tail_l = xl[:, S - 2:S, :]

    # Order must match the panel order in fold_params:
    # [tv, tl, e0v, e0l, e1v, e1l, e(S-1)v, e(S-1)l, e(S-2)v, e(S-2)l]
    pieces = (tv, tl,
              head_v[:, 0, :], head_l[:, 0, :],
              head_v[:, 1, :], head_l[:, 1, :],
              tail_v[:, 1, :], tail_l[:, 1, :],
              tail_v[:, 0, :], tail_l[:, 0, :])

    # Ten K=128 MXU matmuls accumulated in f32 — no (TB, 1280) stacked buffer, no
    # lane concat.  MXU work is free here (kernel is HBM-bound on F_V / F_L).
    acc = None
    for i, piece in enumerate(pieces):
        d = jnp.dot((piece * inv_s).astype(jnp.bfloat16), wbig_ref[i],
                    preferred_element_type=jnp.float32)
        acc = d if acc is None else acc + d
    big = acc + bbig_ref[...]                          # (TB, 256 + D)

    h = jnp.maximum(big[:, :HID], 0.0)                 # BN folded; ReLU; Dropout -> id
    residual = big[:, HID:]                            # (TB, D)

    fused = jnp.dot(h.astype(jnp.bfloat16), wf2_ref[...],
                    preferred_element_type=jnp.float32) + bf2_ref[...]
    o_ref[...] = jnp.maximum(fused + residual, 0.0).astype(o_ref.dtype)


# --------------------------------------------------------------------------- folding

def fold_params(p, D):
    """Fold conv taps, fusion Linear1, BatchNorm (running stats) and the residual
    Linear into ten (D, 256+D) bf16 panels + one f32 bias row.  The 1/S mean scaling
    is applied in-kernel (f32) and is NOT folded here."""
    # Per-tap conv weights folded through the first fusion Linear.
    A1 = jnp.einsum('kio,oh->kih', p["w1"], p["wf1_a"])       # (3, 2D, 256)
    A2 = jnp.einsum('kio,oh->kih', p["w2"], p["wf1_b"])       # (5, 2D, 256)
    W = {off: jnp.zeros((2 * D, HID), jnp.float32) for off in range(-2, 3)}
    for k in range(3):
        W[k - 1] = W[k - 1] + A1[k]                            # k=3 conv, offsets -1..1
    for k in range(5):
        W[k - 2] = W[k - 2] + A2[k]                            # k=5 conv, offsets -2..2
    W[0] = W[0] + p["wf1_c"]                                   # AdaptiveAvgPool path

    # csum(+1)=T-row0, csum(+2)=T-row0-row1, csum(-1)=T-row_{S-1}, csum(-2)=T-row_{S-1}-row_{S-2}
    WT = W[-2] + W[-1] + W[0] + W[1] + W[2]
    We0 = -(W[1] + W[2])
    We1 = -W[2]
    WeL1 = -(W[-1] + W[-2])          # row S-1
    WeL2 = -W[-2]                    # row S-2

    bns = p["bn_scale"]                                        # (1, 256)
    wres = jnp.concatenate([p["wres_v"], p["wres_l"]], axis=0)  # (2D, D), acts on T/S

    def panels(Wpiece, with_res):
        res = wres if with_res else jnp.zeros_like(wres)
        full = jnp.concatenate([Wpiece * bns, res], axis=1)    # (2D, 256+D)
        return full[:D], full[D:]                              # v-half, l-half

    p01 = panels(WT, True)
    p23 = panels(We0, False)
    p45 = panels(We1, False)
    p67 = panels(WeL1, False)
    p89 = panels(WeL2, False)
    wbig = jnp.stack(list(p01 + p23 + p45 + p67 + p89), axis=0)  # (10, D, 256+D)

    bh = ((p["b1"] @ p["wf1_a"] + p["b2"] @ p["wf1_b"] + p["bf1"]) * bns
          + p["bn_shift"])                                     # (1, 256)
    bbig = jnp.concatenate([bh, p["bres"]], axis=1)            # (1, 256+D)
    return {
        "wbig": wbig.astype(jnp.bfloat16),
        "bbig": bbig,
        "wf2": p["wf2"].astype(jnp.bfloat16),
        "bf2": p["bf2"],
    }


# --------------------------------------------------------------------------- wrapper

def choose_tb(B, S, D, budget_bytes=40 << 20):
    """VMEM-aware batch tile: 2 inputs x 2 pipeline buffers of (TB, S, D) f32 under
    `budget_bytes`; capped at 512 rows; >= 2 grid steps for mid/large batches so the
    'parallel' grid axis engages both v7x TensorCores."""
    per_row = 2 * 2 * S * D * 4
    cap = max(8, min(512, (budget_bytes // per_row) // 8 * 8))
    if B <= min(cap, 15):
        return B                                       # tiny batch: single step
    steps = max(2, pl.cdiv(B, cap))
    return min(cap, ((pl.cdiv(B, steps) + 7) // 8) * 8)


def feature_fusion(F_V, F_L, fp, *, tb=None):
    B, S, D = F_V.shape
    assert D == 128, "module is only shape-consistent for input_dim == 128"
    assert S >= 2
    # TODO(synk): for very long sequences (S >~ 512) add an inner "arbitrary" grid axis
    # over S with a VMEM accumulator for the column sums instead of shrinking TB.
    TB = choose_tb(B, S, D) if tb is None else tb
    grid = (pl.cdiv(B, TB),)

    const2 = lambda b: (0, 0)
    const3 = lambda b: (0, 0, 0)
    in_specs = [
        pl.BlockSpec((TB, S, D), lambda b: (b, 0, 0)),                 # F_V
        pl.BlockSpec((TB, S, D), lambda b: (b, 0, 0)),                 # F_L
        # Resident, never-changing weights: single-buffer to save VMEM headroom.
        pl.BlockSpec((10, D, HID + D), const3, pipeline_mode=pl.Buffered(1)),
        pl.BlockSpec((1, HID + D), const2, pipeline_mode=pl.Buffered(1)),
        pl.BlockSpec((HID, D), const2, pipeline_mode=pl.Buffered(1)),
        pl.BlockSpec((1, D), const2, pipeline_mode=pl.Buffered(1)),
    ]

    # Scoped-VMEM limit sized from the actual footprint (+ margin), well under 64 MiB.
    weight_bytes = (10 * D * (HID + D) * 2 + (HID + D) * 4 + HID * D * 2 + D * 4)
    vmem_bytes = (2 * 2 * TB * S * D * 4          # double-buffered inputs
                  + 2 * TB * D * 4 * 2            # double-buffered output
                  + 2 * weight_bytes              # weights (margin even if 1-buffered)
                  + 8 * TB * (HID + D) * 4        # matmul intermediates / accumulator
                  + (4 << 20))                    # slack
    vmem_bytes = int(min(max(vmem_bytes, 16 << 20), 60 << 20))

    return pl.pallas_call(
        fusion_kernel,
        out_shape=jax.ShapeDtypeStruct((B, D), jnp.float32),
        grid=grid,
        in_specs=in_specs,
        out_specs=pl.BlockSpec((TB, D), lambda b: (b, 0)),
        compiler_params=pltpu.CompilerParams(
            dimension_semantics=("parallel",),
            vmem_limit_bytes=vmem_bytes),
    )(F_V, F_L, fp["wbig"], fp["bbig"], fp["wf2"], fp["bf2"])


# --------------------------------------------------------------------------- reference

def reference(F_V, F_L, p):
    """Pure-JAX f32 reference of the PyTorch forward (eval mode)."""
    B, S, D = F_V.shape
    combined = jnp.concatenate([F_V, F_L], axis=-1)            # (B, S, 2D)

    def conv_mean(w, b, pad):
        K = w.shape[0]
        cp = jnp.pad(combined, ((0, 0), (pad, pad), (0, 0)))
        out = sum(jnp.einsum('bsc,co->bso', cp[:, k:k + S, :], w[k]) for k in range(K))
        return out.mean(axis=1) + b

    scale1 = conv_mean(p["w1"], p["b1"], 1)                    # (B, 64)
    scale2 = conv_mean(p["w2"], p["b2"], 2)                    # (B, 64)
    scale3 = combined.mean(axis=1)                             # (B, 2D)
    fused = jnp.concatenate([scale1, scale2, scale3], axis=1)
    wf1 = jnp.concatenate([p["wf1_a"], p["wf1_b"], p["wf1_c"]], axis=0)
    h = fused @ wf1 + p["bf1"]
    h = h * p["bn_scale"] + p["bn_shift"]
    h = jnp.maximum(h, 0.0)
    fused_out = h @ p["wf2"] + p["bf2"]
    wres = jnp.concatenate([p["wres_v"], p["wres_l"]], axis=0)
    residual = jnp.concatenate([F_V.mean(1), F_L.mean(1)], axis=1) @ wres + p["bres"]
    return jnp.maximum(fused_out + residual, 0.0)


def make_params(key, D):
    ks = jax.random.split(key, 14)
    eps = 1e-5
    gamma = 1.0 + 0.1 * jax.random.normal(ks[8], (256,), jnp.float32)
    beta = 0.1 * jax.random.normal(ks[9], (256,), jnp.float32)
    rmean = 0.05 * jax.random.normal(ks[10], (256,), jnp.float32)
    rvar = 1.0 + 0.1 * jnp.abs(jax.random.normal(ks[11], (256,), jnp.float32))
    bn_scale = gamma / jnp.sqrt(rvar + eps)
    bn_shift = beta - rmean * bn_scale
    wf1 = 0.05 * jax.random.normal(ks[6], (3 * D, 256), jnp.float32)   # (in, out)
    wres = 0.05 * jax.random.normal(ks[12], (2 * D, D), jnp.float32)   # (in, out)
    return {
        "w1": 0.05 * jax.random.normal(ks[0], (3, 2 * D, 64), jnp.float32),  # (tap, in, out)
        "b1": 0.05 * jax.random.normal(ks[1], (1, 64), jnp.float32),
        "w2": 0.05 * jax.random.normal(ks[2], (5, 2 * D, 64), jnp.float32),
        "b2": 0.05 * jax.random.normal(ks[3], (1, 64), jnp.float32),
        "wf1_a": wf1[:64], "wf1_b": wf1[64:128], "wf1_c": wf1[128:],
        "bf1": 0.05 * jax.random.normal(ks[7], (1, 256), jnp.float32),
        "bn_scale": bn_scale.reshape(1, 256),
        "bn_shift": bn_shift.reshape(1, 256),
        "wf2": 0.05 * jax.random.normal(ks[4], (256, D), jnp.float32),
        "bf2": 0.05 * jax.random.normal(ks[5], (1, D), jnp.float32),
        "wres_v": wres[:D], "wres_l": wres[D:],
        "bres": 0.05 * jax.random.normal(ks[13], (1, D), jnp.float32),
    }


if __name__ == "__main__":
    # input_dim must be 128 for the module to be shape-consistent (64+64+2D == 3D).
    B, S, D = 8, 8, 128
    key = jax.random.PRNGKey(0)
    k_v, k_l, k_p = jax.random.split(key, 3)
    F_V = jax.random.normal(k_v, (B, S, D), jnp.float32)
    F_L = jax.random.normal(k_l, (B, S, D), jnp.float32)
    params = make_params(k_p, D)
    fp = fold_params(params, D)             # one-time weight folding (host/XLA side)

    out = jax.block_until_ready(feature_fusion(F_V, F_L, fp))
    ref = jax.block_until_ready(reference(F_V, F_L, params))
    # bf16 MXU operands with f32 accumulation -> slightly looser tolerance than f32.
    np.testing.assert_allclose(np.asarray(out), np.asarray(ref), rtol=1e-2, atol=1e-2)
    print("KERNEL_OK")
</pallas_src>

<mosaic_0001>
module attributes {stable_mosaic.version = 11 : i64} {
  func.func @fusion_kernel(%arg0: i32, %arg1: memref<8x8x128xf32, #tpu.memory_space<vmem>>, %arg2: memref<8x8x128xf32, #tpu.memory_space<vmem>>, %arg3: memref<10x128x384xbf16, #tpu.memory_space<vmem>>, %arg4: memref<1x384xf32, #tpu.memory_space<vmem>>, %arg5: memref<256x128xbf16, #tpu.memory_space<vmem>>, %arg6: memref<1x128xf32, #tpu.memory_space<vmem>>, %arg7: memref<8x128xf32, #tpu.memory_space<vmem>>) attributes {dimension_semantics = [#tpu.dimension_semantics<parallel>], iteration_bounds = array<i64: 1>, scalar_prefetch = 0 : i64, scratch_operands = 0 : i64, tpu.core_type = #tpu.core_type<tc>, window_params = [{transform_indices = @transform_0, window_bounds = array<i64: 8, 8, 128>}, {transform_indices = @transform_1, window_bounds = array<i64: 8, 8, 128>}, {pipeline_mode = #tpu.pipeline_mode<synchronous>, transform_indices = @transform_2, window_bounds = array<i64: 10, 128, 384>}, {pipeline_mode = #tpu.pipeline_mode<synchronous>, transform_indices = @transform_3, window_bounds = array<i64: 1, 384>}, {pipeline_mode = #tpu.pipeline_mode<synchronous>, transform_indices = @transform_4, window_bounds = array<i64: 256, 128>}, {pipeline_mode = #tpu.pipeline_mode<synchronous>, transform_indices = @transform_5, window_bounds = array<i64: 1, 128>}, {transform_indices = @transform_6, window_bounds = array<i64: 8, 128>}]} {
    %c0 = arith.constant 0 : index
    %c0_0 = arith.constant 0 : index
    %c0_1 = arith.constant 0 : index
    %0 = vector.load %arg1[%c0, %c0_0, %c0_1] : memref<8x8x128xf32, #tpu.memory_space<vmem>>, vector<8x8x128xf32>
    %c0_2 = arith.constant 0 : index
    %c0_3 = arith.constant 0 : index
    %c0_4 = arith.constant 0 : index
    %1 = vector.load %arg2[%c0_2, %c0_3, %c0_4] : memref<8x8x128xf32, #tpu.memory_space<vmem>>, vector<8x8x128xf32>
    %cst = arith.constant dense<0.000000e+00> : vector<8x128xf32>
    %2 = vector.multi_reduction <add>, %0, %cst [1] : vector<8x8x128xf32> to vector<8x128xf32>
    %cst_5 = arith.constant dense<0.000000e+00> : vector<8x128xf32>
    %3 = vector.multi_reduction <add>, %1, %cst_5 [1] : vector<8x8x128xf32> to vector<8x128xf32>
    %4 = vector.extract_strided_slice %0 {offsets = [0, 0, 0], sizes = [8, 2, 128], strides = [1, 1, 1]} : vector<8x8x128xf32> to vector<8x2x128xf32>
    %5 = vector.extract_strided_slice %1 {offsets = [0, 0, 0], sizes = [8, 2, 128], strides = [1, 1, 1]} : vector<8x8x128xf32> to vector<8x2x128xf32>
    %6 = vector.extract_strided_slice %0 {offsets = [0, 6, 0], sizes = [8, 2, 128], strides = [1, 1, 1]} : vector<8x8x128xf32> to vector<8x2x128xf32>
    %7 = vector.extract_strided_slice %1 {offsets = [0, 6, 0], sizes = [8, 2, 128], strides = [1, 1, 1]} : vector<8x8x128xf32> to vector<8x2x128xf32>
    %8 = vector.extract_strided_slice %4 {offsets = [0, 0, 0], sizes = [8, 1, 128], strides = [1, 1, 1]} : vector<8x2x128xf32> to vector<8x1x128xf32>
    %9 = vector.shape_cast %8 : vector<8x1x128xf32> to vector<8x128xf32>
    %10 = vector.extract_strided_slice %5 {offsets = [0, 0, 0], sizes = [8, 1, 128], strides = [1, 1, 1]} : vector<8x2x128xf32> to vector<8x1x128xf32>
    %11 = vector.shape_cast %10 : vector<8x1x128xf32> to vector<8x128xf32>
    %12 = vector.extract_strided_slice %4 {offsets = [0, 1, 0], sizes = [8, 1, 128], strides = [1, 1, 1]} : vector<8x2x128xf32> to vector<8x1x128xf32>
    %13 = vector.shape_cast %12 : vector<8x1x128xf32> to vector<8x128xf32>
    %14 = vector.extract_strided_slice %5 {offsets = [0, 1, 0], sizes = [8, 1, 128], strides = [1, 1, 1]} : vector<8x2x128xf32> to vector<8x1x128xf32>
    %15 = vector.shape_cast %14 : vector<8x1x128xf32> to vector<8x128xf32>
    %16 = vector.extract_strided_slice %6 {offsets = [0, 1, 0], sizes = [8, 1, 128], strides = [1, 1, 1]} : vector<8x2x128xf32> to vector<8x1x128xf32>
    %17 = vector.shape_cast %16 : vector<8x1x128xf32> to vector<8x128xf32>
    %18 = vector.extract_strided_slice %7 {offsets = [0, 1, 0], sizes = [8, 1, 128], strides = [1, 1, 1]} : vector<8x2x128xf32> to vector<8x1x128xf32>
    %19 = vector.shape_cast %18 : vector<8x1x128xf32> to vector<8x128xf32>
    %20 = vector.extract_strided_slice %6 {offsets = [0, 0, 0], sizes = [8, 1, 128], strides = [1, 1, 1]} : vector<8x2x128xf32> to vector<8x1x128xf32>
    %21 = vector.shape_cast %20 : vector<8x1x128xf32> to vector<8x128xf32>
    %22 = vector.extract_strided_slice %7 {offsets = [0, 0, 0], sizes = [8, 1, 128], strides = [1, 1, 1]} : vector<8x2x128xf32> to vector<8x1x128xf32>
    %23 = vector.shape_cast %22 : vector<8x1x128xf32> to vector<8x128xf32>
    %cst_6 = arith.constant 1.250000e-01 : f32
    %24 = vector.broadcast %cst_6 : f32 to vector<8x128xf32>
    %25 = arith.mulf %2, %24 : vector<8x128xf32>
    %26 = arith.truncf %25 : vector<8x128xf32> to vector<8x128xbf16>
    %c0_7 = arith.constant 0 : index
    %c0_8 = arith.constant 0 : index
    %c0_9 = arith.constant 0 : index
    %27 = vector.load %arg3[%c0_7, %c0_8, %c0_9] : memref<10x128x384xbf16, #tpu.memory_space<vmem>>, vector<1x128x384xbf16>
    %28 = vector.shape_cast %27 : vector<1x128x384xbf16> to vector<128x384xbf16>
    %cst_10 = arith.constant dense<0.000000e+00> : vector<8x384xf32>
    %29 = tpu.matmul %26, %28, %cst_10 {dimension_numbers = #tpu.dot_dimension_numbers<[1], [0], [0], [1], [0, 0, 1, 1], [], []>} : vector<8x128xbf16>, vector<128x384xbf16>, vector<8x384xf32> -> vector<8x384xf32>
    %cst_11 = arith.constant 1.250000e-01 : f32
    %30 = vector.broadcast %cst_11 : f32 to vector<8x128xf32>
    %31 = arith.mulf %3, %30 : vector<8x128xf32>
    %32 = arith.truncf %31 : vector<8x128xf32> to vector<8x128xbf16>
    %c1 = arith.constant 1 : index
    %c0_12 = arith.constant 0 : index
    %c0_13 = arith.constant 0 : index
    %33 = vector.load %arg3[%c1, %c0_12, %c0_13] : memref<10x128x384xbf16, #tpu.memory_space<vmem>>, vector<1x128x384xbf16>
    %34 = vector.shape_cast %33 : vector<1x128x384xbf16> to vector<128x384xbf16>
    %cst_14 = arith.constant dense<0.000000e+00> : vector<8x384xf32>
    %35 = tpu.matmul %32, %34, %cst_14 {dimension_numbers = #tpu.dot_dimension_numbers<[1], [0], [0], [1], [0, 0, 1, 1], [], []>} : vector<8x128xbf16>, vector<128x384xbf16>, vector<8x384xf32> -> vector<8x384xf32>
    %36 = arith.addf %29, %35 : vector<8x384xf32>
    %cst_15 = arith.constant 1.250000e-01 : f32
    %37 = vector.broadcast %cst_15 : f32 to vector<8x128xf32>
    %38 = arith.mulf %9, %37 : vector<8x128xf32>
    %39 = arith.truncf %38 : vector<8x128xf32> to vector<8x128xbf16>
    %c2 = arith.constant 2 : index
    %c0_16 = arith.constant 0 : index
    %c0_17 = arith.constant 0 : index
    %40 = vector.load %arg3[%c2, %c0_16, %c0_17] : memref<10x128x384xbf16, #tpu.memory_space<vmem>>, vector<1x128x384xbf16>
    %41 = vector.shape_cast %40 : vector<1x128x384xbf16> to vector<128x384xbf16>
    %cst_18 = arith.constant dense<0.000000e+00> : vector<8x384xf32>
    %42 = tpu.matmul %39, %41, %cst_18 {dimension_numbers = #tpu.dot_dimension_numbers<[1], [0], [0], [1], [0, 0, 1, 1], [], []>} : vector<8x128xbf16>, vector<128x384xbf16>, vector<8x384xf32> -> vector<8x384xf32>
    %43 = arith.addf %36, %42 : vector<8x384xf32>
    %cst_19 = arith.constant 1.250000e-01 : f32
    %44 = vector.broadcast %cst_19 : f32 to vector<8x128xf32>
    %45 = arith.mulf %11, %44 : vector<8x128xf32>
    %46 = arith.truncf %45 : vector<8x128xf32> to vector<8x128xbf16>
    %c3 = arith.constant 3 : index
    %c0_20 = arith.constant 0 : index
    %c0_21 = arith.constant 0 : index
    %47 = vector.load %arg3[%c3, %c0_20, %c0_21] : memref<10x128x384xbf16, #tpu.memory_space<vmem>>, vector<1x128x384xbf16>
    %48 = vector.shape_cast %47 : vector<1x128x384xbf16> to vector<128x384xbf16>
    %cst_22 = arith.constant dense<0.000000e+00> : vector<8x384xf32>
    %49 = tpu.matmul %46, %48, %cst_22 {dimension_numbers = #tpu.dot_dimension_numbers<[1], [0], [0], [1], [0, 0, 1, 1], [], []>} : vector<8x128xbf16>, vector<128x384xbf16>, vector<8x384xf32> -> vector<8x384xf32>
    %50 = arith.addf %43, %49 : vector<8x384xf32>
    %cst_23 = arith.constant 1.250000e-01 : f32
    %51 = vector.broadcast %cst_23 : f32 to vector<8x128xf32>
    %52 = arith.mulf %13, %51 : vector<8x128xf32>
    %53 = arith.truncf %52 : vector<8x128xf32> to vector<8x128xbf16>
    %c4 = arith.constant 4 : index
    %c0_24 = arith.constant 0 : index
    %c0_25 = arith.constant 0 : index
    %54 = vector.load %arg3[%c4, %c0_24, %c0_25] : memref<10x128x384xbf16, #tpu.memory_space<vmem>>, vector<1x128x384xbf16>
    %55 = vector.shape_cast %54 : vector<1x128x384xbf16> to vector<128x384xbf16>
    %cst_26 = arith.constant dense<0.000000e+00> : vector<8x384xf32>
    %56 = tpu.matmul %53, %55, %cst_26 {dimension_numbers = #tpu.dot_dimension_numbers<[1], [0], [0], [1], [0, 0, 1, 1], [], []>} : vector<8x128xbf16>, vector<128x384xbf16>, vector<8x384xf32> -> vector<8x384xf32>
    %57 = arith.addf %50, %56 : vector<8x384xf32>
    %cst_27 = arith.constant 1.250000e-01 : f32
    %58 = vector.broadcast %cst_27 : f32 to vector<8x128xf32>
    %59 = arith.mulf %15, %58 : vector<8x128xf32>
    %60 = arith.truncf %59 : vector<8x128xf32> to vector<8x128xbf16>
    %c5 = arith.constant 5 : index
    %c0_28 = arith.constant 0 : index
    %c0_29 = arith.constant 0 : index
    %61 = vector.load %arg3[%c5, %c0_28, %c0_29] : memref<10x128x384xbf16, #tpu.memory_space<vmem>>, vector<1x128x384xbf16>
    %62 = vector.shape_cast %61 : vector<1x128x384xbf16> to vector<128x384xbf16>
    %cst_30 = arith.constant dense<0.000000e+00> : vector<8x384xf32>
    %63 = tpu.matmul %60, %62, %cst_30 {dimension_numbers = #tpu.dot_dimension_numbers<[1], [0], [0], [1], [0, 0, 1, 1], [], []>} : vector<8x128xbf16>, vector<128x384xbf16>, vector<8x384xf32> -> vector<8x384xf32>
    %64 = arith.addf %57, %63 : vector<8x384xf32>
    %cst_31 = arith.constant 1.250000e-01 : f32
    %65 = vector.broadcast %cst_31 : f32 to vector<8x128xf32>
    %66 = arith.mulf %17, %65 : vector<8x128xf32>
    %67 = arith.truncf %66 : vector<8x128xf32> to vector<8x128xbf16>
    %c6 = arith.constant 6 : index
    %c0_32 = arith.constant 0 : index
    %c0_33 = arith.constant 0 : index
    %68 = vector.load %arg3[%c6, %c0_32, %c0_33] : memref<10x128x384xbf16, #tpu.memory_space<vmem>>, vector<1x128x384xbf16>
    %69 = vector.shape_cast %68 : vector<1x128x384xbf16> to vector<128x384xbf16>
    %cst_34 = arith.constant dense<0.000000e+00> : vector<8x384xf32>
    %70 = tpu.matmul %67, %69, %cst_34 {dimension_numbers = #tpu.dot_dimension_numbers<[1], [0], [0], [1], [0, 0, 1, 1], [], []>} : vector<8x128xbf16>, vector<128x384xbf16>, vector<8x384xf32> -> vector<8x384xf32>
    %71 = arith.addf %64, %70 : vector<8x384xf32>
    %cst_35 = arith.constant 1.250000e-01 : f32
    %72 = vector.broadcast %cst_35 : f32 to vector<8x128xf32>
    %73 = arith.mulf %19, %72 : vector<8x128xf32>
    %74 = arith.truncf %73 : vector<8x128xf32> to vector<8x128xbf16>
    %c7 = arith.constant 7 : index
    %c0_36 = arith.constant 0 : index
    %c0_37 = arith.constant 0 : index
    %75 = vector.load %arg3[%c7, %c0_36, %c0_37] : memref<10x128x384xbf16, #tpu.memory_space<vmem>>, vector<1x128x384xbf16>
    %76 = vector.shape_cast %75 : vector<1x128x384xbf16> to vector<128x384xbf16>
    %cst_38 = arith.constant dense<0.000000e+00> : vector<8x384xf32>
    %77 = tpu.matmul %74, %76, %cst_38 {dimension_numbers = #tpu.dot_dimension_numbers<[1], [0], [0], [1], [0, 0, 1, 1], [], []>} : vector<8x128xbf16>, vector<128x384xbf16>, vector<8x384xf32> -> vector<8x384xf32>
    %78 = arith.addf %71, %77 : vector<8x384xf32>
    %cst_39 = arith.constant 1.250000e-01 : f32
    %79 = vector.broadcast %cst_39 : f32 to vector<8x128xf32>
    %80 = arith.mulf %21, %79 : vector<8x128xf32>
    %81 = arith.truncf %80 : vector<8x128xf32> to vector<8x128xbf16>
    %c8 = arith.constant 8 : index
    %c0_40 = arith.constant 0 : index
    %c0_41 = arith.constant 0 : index
    %82 = vector.load %arg3[%c8, %c0_40, %c0_41] : memref<10x128x384xbf16, #tpu.memory_space<vmem>>, vector<1x128x384xbf16>
    %83 = vector.shape_cast %82 : vector<1x128x384xbf16> to vector<128x384xbf16>
    %cst_42 = arith.constant dense<0.000000e+00> : vector<8x384xf32>
    %84 = tpu.matmul %81, %83, %cst_42 {dimension_numbers = #tpu.dot_dimension_numbers<[1], [0], [0], [1], [0, 0, 1, 1], [], []>} : vector<8x128xbf16>, vector<128x384xbf16>, vector<8x384xf32> -> vector<8x384xf32>
    %85 = arith.addf %78, %84 : vector<8x384xf32>
    %cst_43 = arith.constant 1.250000e-01 : f32
    %86 = vector.broadcast %cst_43 : f32 to vector<8x128xf32>
    %87 = arith.mulf %23, %86 : vector<8x128xf32>
    %88 = arith.truncf %87 : vector<8x128xf32> to vector<8x128xbf16>
    %c9 = arith.constant 9 : index
    %c0_44 = arith.constant 0 : index
    %c0_45 = arith.constant 0 : index
    %89 = vector.load %arg3[%c9, %c0_44, %c0_45] : memref<10x128x384xbf16, #tpu.memory_space<vmem>>, vector<1x128x384xbf16>
    %90 = vector.shape_cast %89 : vector<1x128x384xbf16> to vector<128x384xbf16>
    %cst_46 = arith.constant dense<0.000000e+00> : vector<8x384xf32>
    %91 = tpu.matmul %88, %90, %cst_46 {dimension_numbers = #tpu.dot_dimension_numbers<[1], [0], [0], [1], [0, 0, 1, 1], [], []>} : vector<8x128xbf16>, vector<128x384xbf16>, vector<8x384xf32> -> vector<8x384xf32>
    %92 = arith.addf %85, %91 : vector<8x384xf32>
    %c0_47 = arith.constant 0 : index
    %c0_48 = arith.constant 0 : index
    %93 = vector.load %arg4[%c0_47, %c0_48] : memref<1x384xf32, #tpu.memory_space<vmem>>, vector<1x384xf32>
    %94 = vector.broadcast %93 : vector<1x384xf32> to vector<8x384xf32>
    %95 = arith.addf %92, %94 : vector<8x384xf32>
    %96 = vector.extract_strided_slice %95 {offsets = [0, 0], sizes = [8, 256], strides = [1, 1]} : vector<8x384xf32> to vector<8x256xf32>
    %cst_49 = arith.constant 0.000000e+00 : f32
    %97 = vector.broadcast %cst_49 : f32 to vector<8x256xf32>
    %98 = arith.maximumf %96, %97 : vector<8x256xf32>
    %99 = vector.extract_strided_slice %95 {offsets = [0, 256], sizes = [8, 128], strides = [1, 1]} : vector<8x384xf32> to vector<8x128xf32>
    %100 = arith.truncf %98 : vector<8x256xf32> to vector<8x256xbf16>
    %c0_50 = arith.constant 0 : index
    %c0_51 = arith.constant 0 : index
    %101 = vector.load %arg5[%c0_50, %c0_51] : memref<256x128xbf16, #tpu.memory_space<vmem>>, vector<256x128xbf16>
    %cst_52 = arith.constant dense<0.000000e+00> : vector<8x128xf32>
    %102 = tpu.matmul %100, %101, %cst_52 {dimension_numbers = #tpu.dot_dimension_numbers<[1], [0], [0], [1], [0, 0, 1, 1], [], []>} : vector<8x256xbf16>, vector<256x128xbf16>, vector<8x128xf32> -> vector<8x128xf32>
    %c0_53 = arith.constant 0 : index
    %c0_54 = arith.constant 0 : index
    %103 = vector.load %arg6[%c0_53, %c0_54] : memref<1x128xf32, #tpu.memory_space<vmem>>, vector<1x128xf32>
    %104 = vector.broadcast %103 : vector<1x128xf32> to vector<8x128xf32>
    %105 = arith.addf %102, %104 : vector<8x128xf32>
    %106 = arith.addf %105, %99 : vector<8x128xf32>
    %cst_55 = arith.constant 0.000000e+00 : f32
    %107 = vector.broadcast %cst_55 : f32 to vector<8x128xf32>
    %108 = arith.maximumf %106, %107 : vector<8x128xf32>
    %c0_56 = arith.constant 0 : index
    %c0_57 = arith.constant 0 : index
    %109 = vector.load %arg7[%c0_56, %c0_57] : memref<8x128xf32, #tpu.memory_space<vmem>>, vector<8x128xf32>
    tpu.vector_store %arg7[%c0_56, %c0_57], %108 {strides = array<i32>} : memref<8x128xf32, #tpu.memory_space<vmem>>, vector<8x128xf32>,
    return
  }
  func.func @transform_0(%arg0: i32) -> (i32, i32, i32) {
    %c0_i32 = arith.constant 0 : i32
    %c0_i32_0 = arith.constant 0 : i32
    %c0_i32_1 = arith.constant 0 : i32
    return %arg0, %c0_i32, %c0_i32_0 : i32, i32, i32
  }
  func.func @transform_1(%arg0: i32) -> (i32, i32, i32) {
    %c0_i32 = arith.constant 0 : i32
    %c0_i32_0 = arith.constant 0 : i32
    %c0_i32_1 = arith.constant 0 : i32
    return %arg0, %c0_i32, %c0_i32_0 : i32, i32, i32
  }
  func.func @transform_2(%arg0: i32) -> (i32, i32, i32) {
    %c0_i32 = arith.constant 0 : i32
    %c0_i32_0 = arith.constant 0 : i32
    %c0_i32_1 = arith.constant 0 : i32
    %c0_i32_2 = arith.constant 0 : i32
    return %c0_i32, %c0_i32_0, %c0_i32_1 : i32, i32, i32
  }
  func.func @transform_3(%arg0: i32) -> (i32, i32) {
    %c0_i32 = arith.constant 0 : i32
    %c0_i32_0 = arith.constant 0 : i32
    %c0_i32_1 = arith.constant 0 : i32
    return %c0_i32, %c0_i32_0 : i32, i32
  }
  func.func @transform_4(%arg0: i32) -> (i32, i32) {
    %c0_i32 = arith.constant 0 : i32
    %c0_i32_0 = arith.constant 0 : i32
    %c0_i32_1 = arith.constant 0 : i32
    return %c0_i32, %c0_i32_0 : i32, i32
  }
  func.func @transform_5(%arg0: i32) -> (i32, i32) {
    %c0_i32 = arith.constant 0 : i32
    %c0_i32_0 = arith.constant 0 : i32
    %c0_i32_1 = arith.constant 0 : i32
    return %c0_i32, %c0_i32_0 : i32, i32
  }
  func.func @transform_6(%arg0: i32) -> (i32, i32) {
    %c0_i32 = arith.constant 0 : i32
    %c0_i32_0 = arith.constant 0 : i32
    return %arg0, %c0_i32 : i32, i32
  }
}

</mosaic_0001>

<llo_original>
// kernel: tpu_custom_call.1
$region0: #{tpu_custom_call.1}
  #allocation0 [shape = 'u32[]', space=smem, size = 0x4, offset = 0x4, fixed_abs, tag = 'smem constant byte address 0x4 - core index']
  #allocation1 [shape = 'u32[72,128]{1,0:T(1,128)}', space=vmem, size = 0x9000, scoped, tag = 'internal scratch']
  %s0 = inlined_call_operand.hbm [shape: f32[8,8,128], index: 0, kind: input, shape index: {}]
  %s1 = inlined_call_operand.hbm [shape: f32[8,8,128], index: 1, kind: input, shape index: {}]
  %s2 = inlined_call_operand.hbm [shape: bf16[10,128,384], index: 2, kind: input, shape index: {}]
  %s3 = inlined_call_operand.hbm [shape: f32[1,384], index: 3, kind: input, shape index: {}]
  %s4 = inlined_call_operand.hbm [shape: bf16[256,128], index: 4, kind: input, shape index: {}]
  %s5 = inlined_call_operand.vmem [shape: f32[1,128], index: 5, kind: input, shape index: {}]
  %s6 = inlined_call_operand.hbm [shape: f32[8,128], index: 6, kind: output, shape index: {}]
  %s7 = sld [smem:[#allocation0]]
  $region54: #{tpu_custom_call.1} parent=0
    _
  %s9 = ssub.s32 1, %s7
  %s10 = scalar_select 0, %s9, %s7
  $region1: #{tpu_custom_call.1} parent=0
    #allocation2 [shape = 'u8[32768]{0}', space=vmem, size = 0x8000, scoped, tag = 'input window, operand 0, single buffered']
    #allocation3 [shape = 's32[1]{0}', space=sflag, size = 0x4, scoped, tag = 'scoped memory for tpu_custom_call.1']
    #allocation4 [shape = 's32[1]{0}', space=sflag, size = 0x4, scoped, tag = 'scoped memory for tpu_custom_call.1']
    #allocation5 [shape = 'u8[32768]{0}', space=vmem, size = 0x8000, scoped, tag = 'input window, operand 1, single buffered']
    #allocation6 [shape = 's32[1]{0}', space=sflag, size = 0x4, scoped, tag = 'scoped memory for tpu_custom_call.1']
    #allocation7 [shape = 'u8[983040]{0}', space=vmem, size = 0xf0000, scoped, tag = 'input window, operand 2, single buffered']
    #allocation8 [shape = 'u8[1536]{0}', space=vmem, size = 0x800, scoped, tag = 'input window, operand 3, single buffered']
    #allocation9 [shape = 's32[1]{0}', space=sflag, size = 0x4, scoped, tag = 'scoped memory for tpu_custom_call.1']
    #allocation10 [shape = 'u8[65536]{0}', space=vmem, size = 0x10000, scoped, tag = 'input window, operand 4, single buffered']
    #allocation11 [shape = 'u8[4096]{0}', space=vmem, size = 0x1000, scoped, tag = 'output window, operand 0, single buffered']
    %11 = vsyncpa [#allocation3], 0
    %12 = vsyncpa [#allocation6], 0
    %13 = vsyncpa [#allocation9], 0
    %14 = vsyncpa [#allocation4], 0
    // Predicated region
    $region2: #{tpu_custom_call.1} parent=1 // pred_check
      _
    $region3: #{tpu_custom_call.1} parent=1 // pred_check_branch
      %16 = sbr.rel (0) target = $region5
    $region4: #{tpu_custom_call.1} parent=1 // pred_region
      %18 = vsyncadd [#allocation3], 0
      %s19 = sshll.u32 %s0, 4
      %s20 = int_to_ptr.hbm [resolvable:$true] %s19
      %s21 = sshll.u32 [#allocation2], 4
      %s22 = int_to_ptr.vmem [resolvable:$true] %s21
      %27 = dma.hbm_to_vmem [thread:$0]  %s20, 1024, %s22, [#allocation3], 128, 128, 8
    $region5: #{tpu_custom_call.1} parent=1 // pred_fallthru
      _
    // Predicated region
    $region6: #{tpu_custom_call.1} parent=1 // pred_check
      _
    $region7: #{tpu_custom_call.1} parent=1 // pred_check_branch
      %29 = sbr.rel (0) target = $region9
    $region8: #{tpu_custom_call.1} parent=1 // pred_region
      %31 = vsyncadd [#allocation6], 0
      %s32 = sshll.u32 %s1, 4
      %s33 = int_to_ptr.hbm [resolvable:$true] %s32
      %s34 = sshll.u32 [#allocation5], 4
      %s35 = int_to_ptr.vmem [resolvable:$true] %s34
      %40 = dma.hbm_to_vmem [thread:$0]  %s33, 1024, %s35, [#allocation6], 128, 128, 8
    $region9: #{tpu_custom_call.1} parent=1 // pred_fallthru
      _
    // Predicated region
    $region10: #{tpu_custom_call.1} parent=1 // pred_check
      _
    $region11: #{tpu_custom_call.1} parent=1 // pred_check_branch
      %42 = sbr.rel (0) target = $region13
    $region12: #{tpu_custom_call.1} parent=1 // pred_region
      %44 = vsyncadd [#allocation6], 0
      %s45 = sshll.u32 %s2, 4
      %s46 = int_to_ptr.hbm [resolvable:$true] %s45
      %s47 = sshll.u32 [#allocation7], 4
      %s48 = int_to_ptr.vmem [resolvable:$true] %s47
      %53 = dma.hbm_to_vmem [thread:$0]  %s46, 30720, %s48, [#allocation6], 192, 192, 12
    $region13: #{tpu_custom_call.1} parent=1 // pred_fallthru
      _
    // Predicated region
    $region14: #{tpu_custom_call.1} parent=1 // pred_check
      _
    $region15: #{tpu_custom_call.1} parent=1 // pred_check_branch
      %55 = sbr.rel (0) target = $region17
    $region16: #{tpu_custom_call.1} parent=1 // pred_region
      %57 = vsyncadd [#allocation9], 0
      %s59 = sshll.u32 %s3, 4
      %s60 = int_to_ptr.hbm [resolvable:$true] %s59
      %s61 = sshll.u32 [#allocation8], 4
      %s62 = int_to_ptr.vmem [resolvable:$true] %s61
      %64 = dma.hbm_to_vmem [thread:$0]  %s60, 48, %s62, [#allocation9]
    $region17: #{tpu_custom_call.1} parent=1 // pred_fallthru
      _
    // Predicated region
    $region18: #{tpu_custom_call.1} parent=1 // pred_check
      _
    $region19: #{tpu_custom_call.1} parent=1 // pred_check_branch
      %66 = sbr.rel (0) target = $region21
    $region20: #{tpu_custom_call.1} parent=1 // pred_region
      %68 = vsyncadd [#allocation9], 0
      %s69 = sshll.u32 %s4, 4
      %s70 = int_to_ptr.hbm [resolvable:$true] %s69
      %s71 = sshll.u32 [#allocation10], 4
      %s72 = int_to_ptr.vmem [resolvable:$true] %s71
      %77 = dma.hbm_to_vmem [thread:$0]  %s70, 2048, %s72, [#allocation9], 64, 64, 4
    $region21: #{tpu_custom_call.1} parent=1 // pred_fallthru
      _
    // Predicated region
    $region22: #{tpu_custom_call.1} parent=1 // pred_check
      _
    $region23: #{tpu_custom_call.1} parent=1 // pred_check_branch
      %79 = sbr.rel (0) target = $region25
    $region24: #{tpu_custom_call.1} parent=1 // pred_region
      _
    $region25: #{tpu_custom_call.1} parent=1 // pred_fallthru
      _
    // Predicated region
    $region26: #{tpu_custom_call.1} parent=1 // pred_check
      _
    $region27: #{tpu_custom_call.1} parent=1 // pred_check_branch
      %81 = sbr.rel (0) target = $region29
    $region28: #{tpu_custom_call.1} parent=1 // pred_region
      %83 = dma.done [#allocation3], 1024
    $region29: #{tpu_custom_call.1} parent=1 // pred_fallthru
      _
    // Predicated region
    $region30: #{tpu_custom_call.1} parent=1 // pred_check
      _
    $region31: #{tpu_custom_call.1} parent=1 // pred_check_branch
      %85 = sbr.rel (0) target = $region33
    $region32: #{tpu_custom_call.1} parent=1 // pred_region
      %87 = dma.done [#allocation6], 1024
    $region33: #{tpu_custom_call.1} parent=1 // pred_fallthru
      _
    // Predicated region
    $region34: #{tpu_custom_call.1} parent=1 // pred_check
      _
    $region35: #{tpu_custom_call.1} parent=1 // pred_check_branch
      %89 = sbr.rel (0) target = $region37
    $region36: #{tpu_custom_call.1} parent=1 // pred_region
      %91 = dma.done [#allocation6], 30720
    $region37: #{tpu_custom_call.1} parent=1 // pred_fallthru
      _
    // Predicated region
    $region38: #{tpu_custom_call.1} parent=1 // pred_check
      _
    $region39: #{tpu_custom_call.1} parent=1 // pred_check_branch
      %93 = sbr.rel (0) target = $region41
    $region40: #{tpu_custom_call.1} parent=1 // pred_region
      %95 = dma.done [#allocation9], 48
    $region41: #{tpu_custom_call.1} parent=1 // pred_fallthru
      _
    // Predicated region
    $region42: #{tpu_custom_call.1} parent=1 // pred_check
      _
    $region43: #{tpu_custom_call.1} parent=1 // pred_check_branch
      %97 = sbr.rel (0) target = $region45
    $region44: #{tpu_custom_call.1} parent=1 // pred_region
      %99 = dma.done [#allocation9], 2048
    $region45: #{tpu_custom_call.1} parent=1 // pred_fallthru
      _
    %v100 = vld [vmem:[#allocation2] sm:$0xff]
    %v101 = vld [vmem:[#allocation2 + $0x8] sm:$0xff]
    %v102 = vld [vmem:[#allocation2 + $0x10] sm:$0xff]
    %v103 = vld [vmem:[#allocation2 + $0x18] sm:$0xff]
    %v104 = vld [vmem:[#allocation2 + $0x20] sm:$0xff]
    %v105 = vld [vmem:[#allocation2 + $0x28] sm:$0xff]
    %v106 = vld [vmem:[#allocation2 + $0x30] sm:$0xff]
    %v107 = vld [vmem:[#allocation2 + $0x38] sm:$0xff]
    %v108 = vld [vmem:[#allocation5] sm:$0xff]
    %v109 = vld [vmem:[#allocation5 + $0x8] sm:$0xff]
    %v110 = vld [vmem:[#allocation5 + $0x10] sm:$0xff]
    %v111 = vld [vmem:[#allocation5 + $0x18] sm:$0xff]
    %v112 = vld [vmem:[#allocation5 + $0x20] sm:$0xff]
    %v113 = vld [vmem:[#allocation5 + $0x28] sm:$0xff]
    %v114 = vld [vmem:[#allocation5 + $0x30] sm:$0xff]
    %v115 = vld [vmem:[#allocation5 + $0x38] sm:$0xff]
    %v116 = vrot.slane %v100, 4
    %v117 = vadd.f32 %v100, %v116
    %v118 = vrot.slane %v117, 2
    %v119 = vadd.f32 %v117, %v118
    %v120 = vrot.slane %v119, 1
    %v121 = vadd.f32 %v119, %v120
    %v122 = vrot.slane %v101, 4
    %v123 = vadd.f32 %v101, %v122
    %v124 = vrot.slane %v123, 2
    %v125 = vadd.f32 %v123, %v124
    %v126 = vrot.slane %v125, 1
    %v127 = vadd.f32 %v125, %v126
    %v128 = vrot.slane %v102, 4
    %v129 = vadd.f32 %v102, %v128
    %v130 = vrot.slane %v129, 2
    %v131 = vadd.f32 %v129, %v130
    %v132 = vrot.slane %v131, 1
    %v133 = vadd.f32 %v131, %v132
    %v134 = vrot.slane %v103, 4
    %v135 = vadd.f32 %v103, %v134
    %v136 = vrot.slane %v135, 2
    %v137 = vadd.f32 %v135, %v136
    %v138 = vrot.slane %v137, 1
    %v139 = vadd.f32 %v137, %v138
    %v140 = vrot.slane %v104, 4
    %v141 = vadd.f32 %v104, %v140
    %v142 = vrot.slane %v141, 2
    %v143 = vadd.f32 %v141, %v142
    %v144 = vrot.slane %v143, 1
    %v145 = vadd.f32 %v143, %v144
    %v146 = vrot.slane %v105, 4
    %v147 = vadd.f32 %v105, %v146
    %v148 = vrot.slane %v147, 2
    %v149 = vadd.f32 %v147, %v148
    %v150 = vrot.slane %v149, 1
    %v151 = vadd.f32 %v149, %v150
    %v152 = vrot.slane %v106, 4
    %v153 = vadd.f32 %v106, %v152
    %v154 = vrot.slane %v153, 2
    %v155 = vadd.f32 %v153, %v154
    %v156 = vrot.slane %v155, 1
    %v157 = vadd.f32 %v155, %v156
    %v158 = vrot.slane %v107, 4
    %v159 = vadd.f32 %v107, %v158
    %v160 = vrot.slane %v159, 2
    %v161 = vadd.f32 %v159, %v160
    %v162 = vrot.slane %v161, 1
    %v163 = vadd.f32 %v161, %v162
    %v164 = vrot.slane %v108, 4
    %v165 = vadd.f32 %v108, %v164
    %v166 = vrot.slane %v165, 2
    %v167 = vadd.f32 %v165, %v166
    %v168 = vrot.slane %v167, 1
    %v169 = vadd.f32 %v167, %v168
    %v170 = vrot.slane %v109, 4
    %v171 = vadd.f32 %v109, %v170
    %v172 = vrot.slane %v171, 2
    %v173 = vadd.f32 %v171, %v172
    %v174 = vrot.slane %v173, 1
    %v175 = vadd.f32 %v173, %v174
    %v176 = vrot.slane %v110, 4
    %v177 = vadd.f32 %v110, %v176
    %v178 = vrot.slane %v177, 2
    %v179 = vadd.f32 %v177, %v178
    %v180 = vrot.slane %v179, 1
    %v181 = vadd.f32 %v179, %v180
    %v182 = vrot.slane %v111, 4
    %v183 = vadd.f32 %v111, %v182
    %v184 = vrot.slane %v183, 2
    %v185 = vadd.f32 %v183, %v184
    %v186 = vrot.slane %v185, 1
    %v187 = vadd.f32 %v185, %v186
    %v188 = vrot.slane %v112, 4
    %v189 = vadd.f32 %v112, %v188
    %v190 = vrot.slane %v189, 2
    %v191 = vadd.f32 %v189, %v190
    %v192 = vrot.slane %v191, 1
    %v193 = vadd.f32 %v191, %v192
    %v194 = vrot.slane %v113, 4
    %v195 = vadd.f32 %v113, %v194
    %v196 = vrot.slane %v195, 2
    %v197 = vadd.f32 %v195, %v196
    %v198 = vrot.slane %v197, 1
    %v199 = vadd.f32 %v197, %v198
    %v200 = vrot.slane %v114, 4
    %v201 = vadd.f32 %v114, %v200
    %v202 = vrot.slane %v201, 2
    %v203 = vadd.f32 %v201, %v202
    %v204 = vrot.slane %v203, 1
    %v205 = vadd.f32 %v203, %v204
    %v206 = vrot.slane %v115, 4
    %v207 = vadd.f32 %v115, %v206
    %v208 = vrot.slane %v207, 2
    %v209 = vadd.f32 %v207, %v208
    %v210 = vrot.slane %v209, 1
    %v211 = vadd.f32 %v209, %v210
    %v212 = vmul.f32 %v121, 0.125
    %v213 = vmul.f32 %v127, 0.125
    %v214 = vmul.f32 %v133, 0.125
    %v215 = vmul.f32 %v139, 0.125
    %v216 = vmul.f32 %v145, 0.125
    %v217 = vmul.f32 %v151, 0.125
    %v218 = vmul.f32 %v157, 0.125
    %v219 = vmul.f32 %v163, 0.125
    %v220 = vpack.c.bf16 %v212, %v212
    %v221 = vpack.c.bf16 %v213, %v213
    %v222 = vpack.c.bf16 %v214, %v214
    %v223 = vpack.c.bf16 %v215, %v215
    %v224 = vpack.c.bf16 %v216, %v216
    %v225 = vpack.c.bf16 %v217, %v217
    %v226 = vpack.c.bf16 %v218, %v218
    %v227 = vpack.c.bf16 %v219, %v219
    %v228 = vld [vmem:[#allocation7] sm:$0xff]
    %v229 = vld [vmem:[#allocation7 + $0x8] sm:$0xf]
    %v230 = vld [vmem:[#allocation7 + $0xc] sm:$0xff]
    %v231 = vld [vmem:[#allocation7 + $0x14] sm:$0xf]
    %v232 = vld [vmem:[#allocation7 + $0x18] sm:$0xff]
    %v233 = vld [vmem:[#allocation7 + $0x20] sm:$0xf]
    %v234 = vld [vmem:[#allocation7 + $0x24] sm:$0xff]
    %v235 = vld [vmem:[#allocation7 + $0x2c] sm:$0xf]
    %v236 = vld [vmem:[#allocation7 + $0x30] sm:$0xff]
    %v237 = vld [vmem:[#allocation7 + $0x38] sm:$0xf]
    %v238 = vld [vmem:[#allocation7 + $0x3c] sm:$0xff]
    %v239 = vld [vmem:[#allocation7 + $0x44] sm:$0xf]
    %v240 = vld [vmem:[#allocation7 + $0x48] sm:$0xff]
    %v241 = vld [vmem:[#allocation7 + $0x50] sm:$0xf]
    %v242 = vld [vmem:[#allocation7 + $0x54] sm:$0xff]
    %v243 = vld [vmem:[#allocation7 + $0x5c] sm:$0xf]
    %v244 = vld [vmem:[#allocation7 + $0x60] sm:$0xff]
    %v245 = vld [vmem:[#allocation7 + $0x68] sm:$0xf]
    %v246 = vld [vmem:[#allocation7 + $0x6c] sm:$0xff]
    %v247 = vld [vmem:[#allocation7 + $0x74] sm:$0xf]
    %v248 = vld [vmem:[#allocation7 + $0x78] sm:$0xff]
    %v249 = vld [vmem:[#allocation7 + $0x80] sm:$0xf]
    %v250 = vld [vmem:[#allocation7 + $0x84] sm:$0xff]
    %v251 = vld [vmem:[#allocation7 + $0x8c] sm:$0xf]
    %v252 = vld [vmem:[#allocation7 + $0x90] sm:$0xff]
    %v253 = vld [vmem:[#allocation7 + $0x98] sm:$0xf]
    %v254 = vld [vmem:[#allocation7 + $0x9c] sm:$0xff]
    %v255 = vld [vmem:[#allocation7 + $0xa4] sm:$0xf]
    %v256 = vld [vmem:[#allocation7 + $0xa8] sm:$0xff]
    %v257 = vld [vmem:[#allocation7 + $0xb0] sm:$0xf]
    %v258 = vld [vmem:[#allocation7 + $0xb4] sm:$0xff]
    %v259 = vld [vmem:[#allocation7 + $0xbc] sm:$0xf]
    %v260 = vmul.f32 %v169, 0.125
    %v261 = vmul.f32 %v175, 0.125
    %v262 = vmul.f32 %v181, 0.125
    %v263 = vmul.f32 %v187, 0.125
    %v264 = vmul.f32 %v193, 0.125
    %v265 = vmul.f32 %v199, 0.125
    %v266 = vmul.f32 %v205, 0.125
    %v267 = vmul.f32 %v211, 0.125
    %v268 = vpack.c.bf16 %v260, %v260
    %v269 = vpack.c.bf16 %v261, %v261
    %v270 = vpack.c.bf16 %v262, %v262
    %v271 = vpack.c.bf16 %v263, %v263
    %v272 = vpack.c.bf16 %v264, %v264
    %v273 = vpack.c.bf16 %v265, %v265
    %v274 = vpack.c.bf16 %v266, %v266
    %v275 = vpack.c.bf16 %v267, %v267
    %s276 = scalar_lea.vmem [#allocation7], 192
    %v277 = vld [vmem:[%s276] sm:$0xff]
    %v278 = vld [vmem:[%s276 + $0x8] sm:$0xf]
    %v279 = vld [vmem:[%s276 + $0xc] sm:$0xff]
    %v280 = vld [vmem:[%s276 + $0x14] sm:$0xf]
    %v281 = vld [vmem:[%s276 + $0x18] sm:$0xff]
    %v282 = vld [vmem:[%s276 + $0x20] sm:$0xf]
    %v283 = vld [vmem:[%s276 + $0x24] sm:$0xff]
    %v284 = vld [vmem:[%s276 + $0x2c] sm:$0xf]
    %v285 = vld [vmem:[%s276 + $0x30] sm:$0xff]
    %v286 = vld [vmem:[%s276 + $0x38] sm:$0xf]
    %v287 = vld [vmem:[%s276 + $0x3c] sm:$0xff]
    %v288 = vld [vmem:[%s276 + $0x44] sm:$0xf]
    %v289 = vld [vmem:[%s276 + $0x48] sm:$0xff]
    %v290 = vld [vmem:[%s276 + $0x50] sm:$0xf]
    %v291 = vld [vmem:[%s276 + $0x54] sm:$0xff]
    %v292 = vld [vmem:[%s276 + $0x5c] sm:$0xf]
    %v293 = vld [vmem:[%s276 + $0x60] sm:$0xff]
    %v294 = vld [vmem:[%s276 + $0x68] sm:$0xf]
    %v295 = vld [vmem:[%s276 + $0x6c] sm:$0xff]
    %v296 = vld [vmem:[%s276 + $0x74] sm:$0xf]
    %v297 = vld [vmem:[%s276 + $0x78] sm:$0xff]
    %v298 = vld [vmem:[%s276 + $0x80] sm:$0xf]
    %v299 = vld [vmem:[%s276 + $0x84] sm:$0xff]
    %v300 = vld [vmem:[%s276 + $0x8c] sm:$0xf]
    %v301 = vld [vmem:[%s276 + $0x90] sm:$0xff]
    %v302 = vld [vmem:[%s276 + $0x98] sm:$0xf]
    %v303 = vld [vmem:[%s276 + $0x9c] sm:$0xff]
    %v304 = vld [vmem:[%s276 + $0xa4] sm:$0xf]
    %v305 = vld [vmem:[%s276 + $0xa8] sm:$0xff]
    %v306 = vld [vmem:[%s276 + $0xb0] sm:$0xf]
    %v307 = vld [vmem:[%s276 + $0xb4] sm:$0xff]
    %v308 = vld [vmem:[%s276 + $0xbc] sm:$0xf]
    %v317 = vunpack.c.l.b16 %v268
    %v318 = vunpack.c.l.b16 %v269
    %v319 = vunpack.c.l.b16 %v270
    %v320 = vunpack.c.l.b16 %v271
    %v321 = vunpack.c.l.b16 %v272
    %v322 = vunpack.c.l.b16 %v273
    %v323 = vunpack.c.l.b16 %v274
    %v324 = vunpack.c.l.b16 %v275
    %vm325 = vcmask 1041409
    %v326 = vsel %vm325, %v318, %v317
    %vm327 = vcmask 1042434
    %v328 = vsel %vm327, %v319, %v326
    %vm329 = vcmask 1043459
    %v330 = vsel %vm329, %v320, %v328
    %vm331 = vcmask 1044484
    %v332 = vsel %vm331, %v321, %v330
    %vm333 = vcmask 1045509
    %v334 = vsel %vm333, %v322, %v332
    %vm335 = vcmask 1046534
    %v336 = vsel %vm335, %v323, %v334
    %vm337 = vcmask 1047559
    %v338 = vsel %vm337, %v324, %v336
    %v339 = vpack.c.b16 %v338, %v338
    %v373 = vunpack.c.l.b16 %v277
    %v374 = vunpack.c.h.b16 %v277
    %v375 = vunpack.c.l.b16 %v278
    %v376 = vunpack.c.l.b16 %v279
    %v377 = vunpack.c.h.b16 %v279
    %v378 = vunpack.c.l.b16 %v280
    %v379 = vunpack.c.l.b16 %v281
    %v380 = vunpack.c.h.b16 %v281
    %v381 = vunpack.c.l.b16 %v282
    %v382 = vunpack.c.l.b16 %v283
    %v383 = vunpack.c.h.b16 %v283
    %v384 = vunpack.c.l.b16 %v284
    %v385 = vunpack.c.l.b16 %v285
    %v386 = vunpack.c.h.b16 %v285
    %v387 = vunpack.c.l.b16 %v286
    %v388 = vunpack.c.l.b16 %v287
    %v389 = vunpack.c.h.b16 %v287
    %v390 = vunpack.c.l.b16 %v288
    %v391 = vunpack.c.l.b16 %v289
    %v392 = vunpack.c.h.b16 %v289
    %v393 = vunpack.c.l.b16 %v290
    %v394 = vunpack.c.l.b16 %v291
    %v395 = vunpack.c.h.b16 %v291
    %v396 = vunpack.c.l.b16 %v292
    %v397 = vunpack.c.l.b16 %v293
    %v398 = vunpack.c.h.b16 %v293
    %v399 = vunpack.c.l.b16 %v294
    %v400 = vunpack.c.l.b16 %v295
    %v401 = vunpack.c.h.b16 %v295
    %v402 = vunpack.c.l.b16 %v296
    %v403 = vunpack.c.l.b16 %v297
    %v404 = vunpack.c.h.b16 %v297
    %v405 = vunpack.c.l.b16 %v298
    %v406 = vunpack.c.l.b16 %v299
    %v407 = vunpack.c.h.b16 %v299
    %v408 = vunpack.c.l.b16 %v300
    %v409 = vunpack.c.l.b16 %v301
    %v410 = vunpack.c.h.b16 %v301
    %v411 = vunpack.c.l.b16 %v302
    %v412 = vunpack.c.l.b16 %v303
    %v413 = vunpack.c.h.b16 %v303
    %v414 = vunpack.c.l.b16 %v304
    %v415 = vunpack.c.l.b16 %v305
    %v416 = vunpack.c.h.b16 %v305
    %v417 = vunpack.c.l.b16 %v306
    %v418 = vunpack.c.l.b16 %v307
    %v419 = vunpack.c.h.b16 %v307
    %v420 = vunpack.c.l.b16 %v308
    %v421 = vpack.c.b16 %v376, %v373
    %v422 = vpack.c.b16 %v377, %v374
    %v423 = vpack.c.b16 %v378, %v375
    %v424 = vpack.c.b16 %v382, %v379
    %v425 = vpack.c.b16 %v383, %v380
    %v426 = vpack.c.b16 %v384, %v381
    %v427 = vpack.c.b16 %v388, %v385
    %v428 = vpack.c.b16 %v389, %v386
    %v429 = vpack.c.b16 %v390, %v387
    %v430 = vpack.c.b16 %v394, %v391
    %v431 = vpack.c.b16 %v395, %v392
    %v432 = vpack.c.b16 %v396, %v393
    %v433 = vpack.c.b16 %v400, %v397
    %v434 = vpack.c.b16 %v401, %v398
    %v435 = vpack.c.b16 %v402, %v399
    %v436 = vpack.c.b16 %v406, %v403
    %v437 = vpack.c.b16 %v407, %v404
    %v438 = vpack.c.b16 %v408, %v405
    %v439 = vpack.c.b16 %v412, %v409
    %v440 = vpack.c.b16 %v413, %v410
    %v441 = vpack.c.b16 %v414, %v411
    %v442 = vpack.c.b16 %v418, %v415
    %v443 = vpack.c.b16 %v419, %v416
    %v444 = vpack.c.b16 %v420, %v417
    %469 = vmatpush.bf16.msra.mxu0 %v442
    %470 = vmatpush.bf16.msra.mxu0 %v439
    %471 = vmatpush.bf16.msra.mxu0 %v436
    %472 = vmatpush.bf16.msra.mxu0 %v433
    %473 = vmatpush.bf16.msra.mxu0 %v430
    %474 = vmatpush.bf16.msra.mxu0 %v427
    %475 = vmatpush.bf16.msra.mxu0 %v424
    %476 = vmatpush.bf16.msra.mxu0 %v421
    %477 = vmatmul.bf16.gmra.mxu0 %v339
    %v478 = vpop.f32.mrf.mxu0
    %v479 = vadd.f32 0.0, %v478
    %v480 = vpop.f32.mrf.mxu0
    %481 = vdwg.mxu0
    %482 = vmatpush.bf16.msra.mxu0 %v443
    %483 = vmatpush.bf16.msra.mxu0 %v440
    %484 = vmatpush.bf16.msra.mxu0 %v437
    %485 = vmatpush.bf16.msra.mxu0 %v434
    %486 = vmatpush.bf16.msra.mxu0 %v431
    %487 = vmatpush.bf16.msra.mxu0 %v428
    %488 = vmatpush.bf16.msra.mxu0 %v425
    %489 = vmatpush.bf16.msra.mxu0 %v422
    %490 = vmatmul.bf16.gmra.mxu0 %v339
    %v491 = vpop.f32.mrf.mxu0
    %v492 = vadd.f32 0.0, %v491
    %v493 = vpop.f32.mrf.mxu0
    %494 = vdwg.mxu0
    %495 = vmatpush.bf16.msra.mxu0 %v444
    %496 = vmatpush.bf16.msra.mxu0 %v441
    %497 = vmatpush.bf16.msra.mxu0 %v438
    %498 = vmatpush.bf16.msra.mxu0 %v435
    %499 = vmatpush.bf16.msra.mxu0 %v432
    %500 = vmatpush.bf16.msra.mxu0 %v429
    %501 = vmatpush.bf16.msra.mxu0 %v426
    %502 = vmatpush.bf16.msra.mxu0 %v423
    %503 = vmatmul.bf16.gmra.mxu0 %v339
    %v504 = vpop.f32.mrf.mxu0
    %v505 = vadd.f32 0.0, %v504
    %v506 = vpop.f32.mrf.mxu0
    %507 = vdwg.mxu0
    %v516 = vunpack.c.l.b16 %v220
    %v517 = vunpack.c.l.b16 %v221
    %v518 = vunpack.c.l.b16 %v222
    %v519 = vunpack.c.l.b16 %v223
    %v520 = vunpack.c.l.b16 %v224
    %v521 = vunpack.c.l.b16 %v225
    %v522 = vunpack.c.l.b16 %v226
    %v523 = vunpack.c.l.b16 %v227
    %v524 = vsel %vm325, %v517, %v516
    %v525 = vsel %vm327, %v518, %v524
    %v526 = vsel %vm329, %v519, %v525
    %v527 = vsel %vm331, %v520, %v526
    %v528 = vsel %vm333, %v521, %v527
    %v529 = vsel %vm335, %v522, %v528
    %v530 = vsel %vm337, %v523, %v529
    %v531 = vpack.c.b16 %v530, %v530
    %v565 = vunpack.c.l.b16 %v228
    %v566 = vunpack.c.h.b16 %v228
    %v567 = vunpack.c.l.b16 %v229
    %v568 = vunpack.c.l.b16 %v230
    %v569 = vunpack.c.h.b16 %v230
    %v570 = vunpack.c.l.b16 %v231
    %v571 = vunpack.c.l.b16 %v232
    %v572 = vunpack.c.h.b16 %v232
    %v573 = vunpack.c.l.b16 %v233
    %v574 = vunpack.c.l.b16 %v234
    %v575 = vunpack.c.h.b16 %v234
    %v576 = vunpack.c.l.b16 %v235
    %v577 = vunpack.c.l.b16 %v236
    %v578 = vunpack.c.h.b16 %v236
    %v579 = vunpack.c.l.b16 %v237
    %v580 = vunpack.c.l.b16 %v238
    %v581 = vunpack.c.h.b16 %v238
    %v582 = vunpack.c.l.b16 %v239
    %v583 = vunpack.c.l.b16 %v240
    %v584 = vunpack.c.h.b16 %v240
    %v585 = vunpack.c.l.b16 %v241
    %v586 = vunpack.c.l.b16 %v242
    %v587 = vunpack.c.h.b16 %v242
    %v588 = vunpack.c.l.b16 %v243
    %v589 = vunpack.c.l.b16 %v244
    %v590 = vunpack.c.h.b16 %v244
    %v591 = vunpack.c.l.b16 %v245
    %v592 = vunpack.c.l.b16 %v246
    %v593 = vunpack.c.h.b16 %v246
    %v594 = vunpack.c.l.b16 %v247
    %v595 = vunpack.c.l.b16 %v248
    %v596 = vunpack.c.h.b16 %v248
    %v597 = vunpack.c.l.b16 %v249
    %v598 = vunpack.c.l.b16 %v250
    %v599 = vunpack.c.h.b16 %v250
    %v600 = vunpack.c.l.b16 %v251
    %v601 = vunpack.c.l.b16 %v252
    %v602 = vunpack.c.h.b16 %v252
    %v603 = vunpack.c.l.b16 %v253
    %v604 = vunpack.c.l.b16 %v254
    %v605 = vunpack.c.h.b16 %v254
    %v606 = vunpack.c.l.b16 %v255
    %v607 = vunpack.c.l.b16 %v256
    %v608 = vunpack.c.h.b16 %v256
    %v609 = vunpack.c.l.b16 %v257
    %v610 = vunpack.c.l.b16 %v258
    %v611 = vunpack.c.h.b16 %v258
    %v612 = vunpack.c.l.b16 %v259
    %v613 = vpack.c.b16 %v568, %v565
    %v614 = vpack.c.b16 %v569, %v566
    %v615 = vpack.c.b16 %v570, %v567
    %v616 = vpack.c.b16 %v574, %v571
    %v617 = vpack.c.b16 %v575, %v572
    %v618 = vpack.c.b16 %v576, %v573
    %v619 = vpack.c.b16 %v580, %v577
    %v620 = vpack.c.b16 %v581, %v578
    %v621 = vpack.c.b16 %v582, %v579
    %v622 = vpack.c.b16 %v586, %v583
    %v623 = vpack.c.b16 %v587, %v584
    %v624 = vpack.c.b16 %v588, %v585
    %v625 = vpack.c.b16 %v592, %v589
    %v626 = vpack.c.b16 %v593, %v590
    %v627 = vpack.c.b16 %v594, %v591
    %v628 = vpack.c.b16 %v598, %v595
    %v629 = vpack.c.b16 %v599, %v596
    %v630 = vpack.c.b16 %v600, %v597
    %v631 = vpack.c.b16 %v604, %v601
    %v632 = vpack.c.b16 %v605, %v602
    %v633 = vpack.c.b16 %v606, %v603
    %v634 = vpack.c.b16 %v610, %v607
    %v635 = vpack.c.b16 %v611, %v608
    %v636 = vpack.c.b16 %v612, %v609
    %661 = vmatpush.bf16.msra.mxu0 %v634
    %662 = vmatpush.bf16.msra.mxu0 %v631
    %663 = vmatpush.bf16.msra.mxu0 %v628
    %664 = vmatpush.bf16.msra.mxu0 %v625
    %665 = vmatpush.bf16.msra.mxu0 %v622
    %666 = vmatpush.bf16.msra.mxu0 %v619
    %667 = vmatpush.bf16.msra.mxu0 %v616
    %668 = vmatpush.bf16.msra.mxu0 %v613
    %669 = vmatmul.bf16.gmra.mxu0 %v531
    %v670 = vpop.f32.mrf.mxu0
    %v671 = vadd.f32 %v479, %v670
    %v672 = vpop.f32.mrf.mxu0
    %673 = vdwg.mxu0
    %674 = vmatpush.bf16.msra.mxu0 %v635
    %675 = vmatpush.bf16.msra.mxu0 %v632
    %676 = vmatpush.bf16.msra.mxu0 %v629
    %677 = vmatpush.bf16.msra.mxu0 %v626
    %678 = vmatpush.bf16.msra.mxu0 %v623
    %679 = vmatpush.bf16.msra.mxu0 %v620
    %680 = vmatpush.bf16.msra.mxu0 %v617
    %681 = vmatpush.bf16.msra.mxu0 %v614
    %682 = vmatmul.bf16.gmra.mxu0 %v531
    %v683 = vpop.f32.mrf.mxu0
    %v684 = vadd.f32 %v492, %v683
    %v685 = vpop.f32.mrf.mxu0
    %686 = vdwg.mxu0
    %687 = vmatpush.bf16.msra.mxu0 %v636
    %688 = vmatpush.bf16.msra.mxu0 %v633
    %689 = vmatpush.bf16.msra.mxu0 %v630
    %690 = vmatpush.bf16.msra.mxu0 %v627
    %691 = vmatpush.bf16.msra.mxu0 %v624
    %692 = vmatpush.bf16.msra.mxu0 %v621
    %693 = vmatpush.bf16.msra.mxu0 %v618
    %694 = vmatpush.bf16.msra.mxu0 %v615
    %695 = vmatmul.bf16.gmra.mxu0 %v531
    %v696 = vpop.f32.mrf.mxu0
    %v697 = vadd.f32 %v505, %v696
    %v698 = vpop.f32.mrf.mxu0
    %699 = vdwg.mxu0
    %v700 = vmul.f32 %v100, 0.125
    %v701 = vmul.f32 %v101, 0.125
    %v702 = vmul.f32 %v102, 0.125
    %v703 = vmul.f32 %v103, 0.125
    %v704 = vmul.f32 %v104, 0.125
    %v705 = vmul.f32 %v105, 0.125
    %v706 = vmul.f32 %v106, 0.125
    %v707 = vmul.f32 %v107, 0.125
    %v708 = vpack.c.bf16 %v700, %v700
    %v709 = vpack.c.bf16 %v701, %v701
    %v710 = vpack.c.bf16 %v702, %v702
    %v711 = vpack.c.bf16 %v703, %v703
    %v712 = vpack.c.bf16 %v704, %v704
    %v713 = vpack.c.bf16 %v705, %v705
    %v714 = vpack.c.bf16 %v706, %v706
    %v715 = vpack.c.bf16 %v707, %v707
    %s716 = scalar_lea.vmem [#allocation7], 384
    %v717 = vld [vmem:[%s716] sm:$0xff]
    %v718 = vld [vmem:[%s716 + $0x8] sm:$0xf]
    %v719 = vld [vmem:[%s716 + $0xc] sm:$0xff]
    %v720 = vld [vmem:[%s716 + $0x14] sm:$0xf]
    %v721 = vld [vmem:[%s716 + $0x18] sm:$0xff]
    %v722 = vld [vmem:[%s716 + $0x20] sm:$0xf]
    %v723 = vld [vmem:[%s716 + $0x24] sm:$0xff]
    %v724 = vld [vmem:[%s716 + $0x2c] sm:$0xf]
    %v725 = vld [vmem:[%s716 + $0x30] sm:$0xff]
    %v726 = vld [vmem:[%s716 + $0x38] sm:$0xf]
    %v727 = vld [vmem:[%s716 + $0x3c] sm:$0xff]
    %v728 = vld [vmem:[%s716 + $0x44] sm:$0xf]
    %v729 = vld [vmem:[%s716 + $0x48] sm:$0xff]
    %v730 = vld [vmem:[%s716 + $0x50] sm:$0xf]
    %v731 = vld [vmem:[%s716 + $0x54] sm:$0xff]
    %v732 = vld [vmem:[%s716 + $0x5c] sm:$0xf]
    %v733 = vld [vmem:[%s716 + $0x60] sm:$0xff]
    %v734 = vld [vmem:[%s716 + $0x68] sm:$0xf]
    %v735 = vld [vmem:[%s716 + $0x6c] sm:$0xff]
    %v736 = vld [vmem:[%s716 + $0x74] sm:$0xf]
    %v737 = vld [vmem:[%s716 + $0x78] sm:$0xff]
    %v738 = vld [vmem:[%s716 + $0x80] sm:$0xf]
    %v739 = vld [vmem:[%s716 + $0x84] sm:$0xff]
    %v740 = vld [vmem:[%s716 + $0x8c] sm:$0xf]
    %v741 = vld [vmem:[%s716 + $0x90] sm:$0xff]
    %v742 = vld [vmem:[%s716 + $0x98] sm:$0xf]
    %v743 = vld [vmem:[%s716 + $0x9c] sm:$0xff]
    %v744 = vld [vmem:[%s716 + $0xa4] sm:$0xf]
    %v745 = vld [vmem:[%s716 + $0xa8] sm:$0xff]
    %v746 = vld [vmem:[%s716 + $0xb0] sm:$0xf]
    %v747 = vld [vmem:[%s716 + $0xb4] sm:$0xff]
    %v748 = vld [vmem:[%s716 + $0xbc] sm:$0xf]
    %v757 = vunpack.c.l.b16 %v708
    %v758 = vunpack.c.l.b16 %v709
    %v759 = vunpack.c.l.b16 %v710
    %v760 = vunpack.c.l.b16 %v711
    %v761 = vunpack.c.l.b16 %v712
    %v762 = vunpack.c.l.b16 %v713
    %v763 = vunpack.c.l.b16 %v714
    %v764 = vunpack.c.l.b16 %v715
    %v765 = vrot.slane %v758, 7
    %v766 = vsel %vm325, %v765, %v757
    %v767 = vrot.slane %v759, 6
    %v768 = vsel %vm327, %v767, %v766
    %v769 = vrot.slane %v760, 5
    %v770 = vsel %vm329, %v769, %v768
    %v771 = vrot.slane %v761, 4
    %v772 = vsel %vm331, %v771, %v770
    %v773 = vrot.slane %v762, 3
    %v774 = vsel %vm333, %v773, %v772
    %v775 = vrot.slane %v763, 2
    %v776 = vsel %vm335, %v775, %v774
    %v777 = vrot.slane %v764, 1
    %v778 = vsel %vm337, %v777, %v776
    %v779 = vpack.c.b16 %v778, %v778
    %v813 = vunpack.c.l.b16 %v717
    %v814 = vunpack.c.h.b16 %v717
    %v815 = vunpack.c.l.b16 %v718
    %v816 = vunpack.c.l.b16 %v719
    %v817 = vunpack.c.h.b16 %v719
    %v818 = vunpack.c.l.b16 %v720
    %v819 = vunpack.c.l.b16 %v721
    %v820 = vunpack.c.h.b16 %v721
    %v821 = vunpack.c.l.b16 %v722
    %v822 = vunpack.c.l.b16 %v723
    %v823 = vunpack.c.h.b16 %v723
    %v824 = vunpack.c.l.b16 %v724
    %v825 = vunpack.c.l.b16 %v725
    %v826 = vunpack.c.h.b16 %v725
    %v827 = vunpack.c.l.b16 %v726
    %v828 = vunpack.c.l.b16 %v727
    %v829 = vunpack.c.h.b16 %v727
    %v830 = vunpack.c.l.b16 %v728
    %v831 = vunpack.c.l.b16 %v729
    %v832 = vunpack.c.h.b16 %v729
    %v833 = vunpack.c.l.b16 %v730
    %v834 = vunpack.c.l.b16 %v731
    %v835 = vunpack.c.h.b16 %v731
    %v836 = vunpack.c.l.b16 %v732
    %v837 = vunpack.c.l.b16 %v733
    %v838 = vunpack.c.h.b16 %v733
    %v839 = vunpack.c.l.b16 %v734
    %v840 = vunpack.c.l.b16 %v735
    %v841 = vunpack.c.h.b16 %v735
    %v842 = vunpack.c.l.b16 %v736
    %v843 = vunpack.c.l.b16 %v737
    %v844 = vunpack.c.h.b16 %v737
    %v845 = vunpack.c.l.b16 %v738
    %v846 = vunpack.c.l.b16 %v739
    %v847 = vunpack.c.h.b16 %v739
    %v848 = vunpack.c.l.b16 %v740
    %v849 = vunpack.c.l.b16 %v741
    %v850 = vunpack.c.h.b16 %v741
    %v851 = vunpack.c.l.b16 %v742
    %v852 = vunpack.c.l.b16 %v743
    %v853 = vunpack.c.h.b16 %v743
    %v854 = vunpack.c.l.b16 %v744
    %v855 = vunpack.c.l.b16 %v745
    %v856 = vunpack.c.h.b16 %v745
    %v857 = vunpack.c.l.b16 %v746
    %v858 = vunpack.c.l.b16 %v747
    %v859 = vunpack.c.h.b16 %v747
    %v860 = vunpack.c.l.b16 %v748
    %v861 = vpack.c.b16 %v816, %v813
    %v862 = vpack.c.b16 %v817, %v814
    %v863 = vpack.c.b16 %v818, %v815
    %v864 = vpack.c.b16 %v822, %v819
    %v865 = vpack.c.b16 %v823, %v820
    %v866 = vpack.c.b16 %v824, %v821
    %v867 = vpack.c.b16 %v828, %v825
    %v868 = vpack.c.b16 %v829, %v826
    %v869 = vpack.c.b16 %v830, %v827
    %v870 = vpack.c.b16 %v834, %v831
    %v871 = vpack.c.b16 %v835, %v832
    %v872 = vpack.c.b16 %v836, %v833
    %v873 = vpack.c.b16 %v840, %v837
    %v874 = vpack.c.b16 %v841, %v838
    %v875 = vpack.c.b16 %v842, %v839
    %v876 = vpack.c.b16 %v846, %v843
    %v877 = vpack.c.b16 %v847, %v844
    %v878 = vpack.c.b16 %v848, %v845
    %v879 = vpack.c.b16 %v852, %v849
    %v880 = vpack.c.b16 %v853, %v850
    %v881 = vpack.c.b16 %v854, %v851
    %v882 = vpack.c.b16 %v858, %v855
    %v883 = vpack.c.b16 %v859, %v856
    %v884 = vpack.c.b16 %v860, %v857
    %909 = vmatpush.bf16.msra.mxu0 %v882
    %910 = vmatpush.bf16.msra.mxu0 %v879
    %911 = vmatpush.bf16.msra.mxu0 %v876
    %912 = vmatpush.bf16.msra.mxu0 %v873
    %913 = vmatpush.bf16.msra.mxu0 %v870
    %914 = vmatpush.bf16.msra.mxu0 %v867
    %915 = vmatpush.bf16.msra.mxu0 %v864
    %916 = vmatpush.bf16.msra.mxu0 %v861
    %917 = vmatmul.bf16.gmra.mxu0 %v779
    %v918 = vpop.f32.mrf.mxu0
    %v919 = vadd.f32 0.0, %v918
    %v920 = vpop.f32.mrf.mxu0
    %921 = vdwg.mxu0
    %922 = vmatpush.bf16.msra.mxu0 %v883
    %923 = vmatpush.bf16.msra.mxu0 %v880
    %924 = vmatpush.bf16.msra.mxu0 %v877
    %925 = vmatpush.bf16.msra.mxu0 %v874
    %926 = vmatpush.bf16.msra.mxu0 %v871
    %927 = vmatpush.bf16.msra.mxu0 %v868
    %928 = vmatpush.bf16.msra.mxu0 %v865
    %929 = vmatpush.bf16.msra.mxu0 %v862
    %930 = vmatmul.bf16.gmra.mxu0 %v779
    %v931 = vpop.f32.mrf.mxu0
    %v932 = vadd.f32 0.0, %v931
    %v933 = vpop.f32.mrf.mxu0
    %934 = vdwg.mxu0
    %935 = vmatpush.bf16.msra.mxu0 %v884
    %936 = vmatpush.bf16.msra.mxu0 %v881
    %937 = vmatpush.bf16.msra.mxu0 %v878
    %938 = vmatpush.bf16.msra.mxu0 %v875
    %939 = vmatpush.bf16.msra.mxu0 %v872
    %940 = vmatpush.bf16.msra.mxu0 %v869
    %941 = vmatpush.bf16.msra.mxu0 %v866
    %942 = vmatpush.bf16.msra.mxu0 %v863
    %943 = vmatmul.bf16.gmra.mxu0 %v779
    %v944 = vpop.f32.mrf.mxu0
    %v945 = vadd.f32 0.0, %v944
    %v946 = vpop.f32.mrf.mxu0
    %947 = vdwg.mxu0
    %v948 = vadd.f32 %v671, %v919
    %v949 = vadd.f32 %v684, %v932
    %v950 = vadd.f32 %v697, %v945
    %v951 = vmul.f32 %v108, 0.125
    %v952 = vmul.f32 %v109, 0.125
    %v953 = vmul.f32 %v110, 0.125
    %v954 = vmul.f32 %v111, 0.125
    %v955 = vmul.f32 %v112, 0.125
    %v956 = vmul.f32 %v113, 0.125
    %v957 = vmul.f32 %v114, 0.125
    %v958 = vmul.f32 %v115, 0.125
    %v959 = vpack.c.bf16 %v951, %v951
    %v960 = vpack.c.bf16 %v952, %v952
    %v961 = vpack.c.bf16 %v953, %v953
    %v962 = vpack.c.bf16 %v954, %v954
    %v963 = vpack.c.bf16 %v955, %v955
    %v964 = vpack.c.bf16 %v956, %v956
    %v965 = vpack.c.bf16 %v957, %v957
    %v966 = vpack.c.bf16 %v958, %v958
    %s967 = scalar_lea.vmem [#allocation7], 576
    %v968 = vld [vmem:[%s967] sm:$0xff]
    %v969 = vld [vmem:[%s967 + $0x8] sm:$0xf]
    %v970 = vld [vmem:[%s967 + $0xc] sm:$0xff]
    %v971 = vld [vmem:[%s967 + $0x14] sm:$0xf]
    %v972 = vld [vmem:[%s967 + $0x18] sm:$0xff]
    %v973 = vld [vmem:[%s967 + $0x20] sm:$0xf]
    %v974 = vld [vmem:[%s967 + $0x24] sm:$0xff]
    %v975 = vld [vmem:[%s967 + $0x2c] sm:$0xf]
    %v976 = vld [vmem:[%s967 + $0x30] sm:$0xff]
    %v977 = vld [vmem:[%s967 + $0x38] sm:$0xf]
    %v978 = vld [vmem:[%s967 + $0x3c] sm:$0xff]
    %v979 = vld [vmem:[%s967 + $0x44] sm:$0xf]
    %v980 = vld [vmem:[%s967 + $0x48] sm:$0xff]
    %v981 = vld [vmem:[%s967 + $0x50] sm:$0xf]
    %v982 = vld [vmem:[%s967 + $0x54] sm:$0xff]
    %v983 = vld [vmem:[%s967 + $0x5c] sm:$0xf]
    %v984 = vld [vmem:[%s967 + $0x60] sm:$0xff]
    %v985 = vld [vmem:[%s967 + $0x68] sm:$0xf]
    %v986 = vld [vmem:[%s967 + $0x6c] sm:$0xff]
    %v987 = vld [vmem:[%s967 + $0x74] sm:$0xf]
    %v988 = vld [vmem:[%s967 + $0x78] sm:$0xff]
    %v989 = vld [vmem:[%s967 + $0x80] sm:$0xf]
    %v990 = vld [vmem:[%s967 + $0x84] sm:$0xff]
    %v991 = vld [vmem:[%s967 + $0x8c] sm:$0xf]
    %v992 = vld [vmem:[%s967 + $0x90] sm:$0xff]
    %v993 = vld [vmem:[%s967 + $0x98] sm:$0xf]
    %v994 = vld [vmem:[%s967 + $0x9c] sm:$0xff]
    %v995 = vld [vmem:[%s967 + $0xa4] sm:$0xf]
    %v996 = vld [vmem:[%s967 + $0xa8] sm:$0xff]
    %v997 = vld [vmem:[%s967 + $0xb0] sm:$0xf]
    %v998 = vld [vmem:[%s967 + $0xb4] sm:$0xff]
    %v999 = vld [vmem:[%s967 + $0xbc] sm:$0xf]
    %v1008 = vunpack.c.l.b16 %v959
    %v1009 = vunpack.c.l.b16 %v960
    %v1010 = vunpack.c.l.b16 %v961
    %v1011 = vunpack.c.l.b16 %v962
    %v1012 = vunpack.c.l.b16 %v963
    %v1013 = vunpack.c.l.b16 %v964
    %v1014 = vunpack.c.l.b16 %v965
    %v1015 = vunpack.c.l.b16 %v966
    %v1016 = vrot.slane %v1009, 7
    %v1017 = vsel %vm325, %v1016, %v1008
    %v1018 = vrot.slane %v1010, 6
    %v1019 = vsel %vm327, %v1018, %v1017
    %v1020 = vrot.slane %v1011, 5
    %v1021 = vsel %vm329, %v1020, %v1019
    %v1022 = vrot.slane %v1012, 4
    %v1023 = vsel %vm331, %v1022, %v1021
    %v1024 = vrot.slane %v1013, 3
    %v1025 = vsel %vm333, %v1024, %v1023
    %v1026 = vrot.slane %v1014, 2
    %v1027 = vsel %vm335, %v1026, %v1025
    %v1028 = vrot.slane %v1015, 1
    %v1029 = vsel %vm337, %v1028, %v1027
    %v1030 = vpack.c.b16 %v1029, %v1029
    %v1064 = vunpack.c.l.b16 %v968
    %v1065 = vunpack.c.h.b16 %v968
    %v1066 = vunpack.c.l.b16 %v969
    %v1067 = vunpack.c.l.b16 %v970
    %v1068 = vunpack.c.h.b16 %v970
    %v1069 = vunpack.c.l.b16 %v971
    %v1070 = vunpack.c.l.b16 %v972
    %v1071 = vunpack.c.h.b16 %v972
    %v1072 = vunpack.c.l.b16 %v973
    %v1073 = vunpack.c.l.b16 %v974
    %v1074 = vunpack.c.h.b16 %v974
    %v1075 = vunpack.c.l.b16 %v975
    %v1076 = vunpack.c.l.b16 %v976
    %v1077 = vunpack.c.h.b16 %v976
    %v1078 = vunpack.c.l.b16 %v977
    %v1079 = vunpack.c.l.b16 %v978
    %v1080 = vunpack.c.h.b16 %v978
    %v1081 = vunpack.c.l.b16 %v979
    %v1082 = vunpack.c.l.b16 %v980
    %v1083 = vunpack.c.h.b16 %v980
    %v1084 = vunpack.c.l.b16 %v981
    %v1085 = vunpack.c.l.b16 %v982
    %v1086 = vunpack.c.h.b16 %v982
    %v1087 = vunpack.c.l.b16 %v983
    %v1088 = vunpack.c.l.b16 %v984
    %v1089 = vunpack.c.h.b16 %v984
    %v1090 = vunpack.c.l.b16 %v985
    %v1091 = vunpack.c.l.b16 %v986
    %v1092 = vunpack.c.h.b16 %v986
    %v1093 = vunpack.c.l.b16 %v987
    %v1094 = vunpack.c.l.b16 %v988
    %v1095 = vunpack.c.h.b16 %v988
    %v1096 = vunpack.c.l.b16 %v989
    %v1097 = vunpack.c.l.b16 %v990
    %v1098 = vunpack.c.h.b16 %v990
    %v1099 = vunpack.c.l.b16 %v991
    %v1100 = vunpack.c.l.b16 %v992
    %v1101 = vunpack.c.h.b16 %v992
    %v1102 = vunpack.c.l.b16 %v993
    %v1103 = vunpack.c.l.b16 %v994
    %v1104 = vunpack.c.h.b16 %v994
    %v1105 = vunpack.c.l.b16 %v995
    %v1106 = vunpack.c.l.b16 %v996
    %v1107 = vunpack.c.h.b16 %v996
    %v1108 = vunpack.c.l.b16 %v997
    %v1109 = vunpack.c.l.b16 %v998
    %v1110 = vunpack.c.h.b16 %v998
    %v1111 = vunpack.c.l.b16 %v999
    %v1112 = vpack.c.b16 %v1067, %v1064
    %v1113 = vpack.c.b16 %v1068, %v1065
    %v1114 = vpack.c.b16 %v1069, %v1066
    %v1115 = vpack.c.b16 %v1073, %v1070
    %v1116 = vpack.c.b16 %v1074, %v1071
    %v1117 = vpack.c.b16 %v1075, %v1072
    %v1118 = vpack.c.b16 %v1079, %v1076
    %v1119 = vpack.c.b16 %v1080, %v1077
    %v1120 = vpack.c.b16 %v1081, %v1078
    %v1121 = vpack.c.b16 %v1085, %v1082
    %v1122 = vpack.c.b16 %v1086, %v1083
    %v1123 = vpack.c.b16 %v1087, %v1084
    %v1124 = vpack.c.b16 %v1091, %v1088
    %v1125 = vpack.c.b16 %v1092, %v1089
    %v1126 = vpack.c.b16 %v1093, %v1090
    %v1127 = vpack.c.b16 %v1097, %v1094
    %v1128 = vpack.c.b16 %v1098, %v1095
    %v1129 = vpack.c.b16 %v1099, %v1096
    %v1130 = vpack.c.b16 %v1103, %v1100
    %v1131 = vpack.c.b16 %v1104, %v1101
    %v1132 = vpack.c.b16 %v1105, %v1102
    %v1133 = vpack.c.b16 %v1109, %v1106
    %v1134 = vpack.c.b16 %v1110, %v1107
    %v1135 = vpack.c.b16 %v1111, %v1108
    %1160 = vmatpush.bf16.msra.mxu0 %v1133
    %1161 = vmatpush.bf16.msra.mxu0 %v1130
    %1162 = vmatpush.bf16.msra.mxu0 %v1127
    %1163 = vmatpush.bf16.msra.mxu0 %v1124
    %1164 = vmatpush.bf16.msra.mxu0 %v1121
    %1165 = vmatpush.bf16.msra.mxu0 %v1118
    %1166 = vmatpush.bf16.msra.mxu0 %v1115
    %1167 = vmatpush.bf16.msra.mxu0 %v1112
    %1168 = vmatmul.bf16.gmra.mxu0 %v1030
    %v1169 = vpop.f32.mrf.mxu0
    %v1170 = vadd.f32 0.0, %v1169
    %v1171 = vpop.f32.mrf.mxu0
    %1172 = vdwg.mxu0
    %1173 = vmatpush.bf16.msra.mxu0 %v1134
    %1174 = vmatpush.bf16.msra.mxu0 %v1131
    %1175 = vmatpush.bf16.msra.mxu0 %v1128
    %1176 = vmatpush.bf16.msra.mxu0 %v1125
    %1177 = vmatpush.bf16.msra.mxu0 %v1122
    %1178 = vmatpush.bf16.msra.mxu0 %v1119
    %1179 = vmatpush.bf16.msra.mxu0 %v1116
    %1180 = vmatpush.bf16.msra.mxu0 %v1113
    %1181 = vmatmul.bf16.gmra.mxu0 %v1030
    %v1182 = vpop.f32.mrf.mxu0
    %v1183 = vadd.f32 0.0, %v1182
    %v1184 = vpop.f32.mrf.mxu0
    %1185 = vdwg.mxu0
    %1186 = vmatpush.bf16.msra.mxu0 %v1135
    %1187 = vmatpush.bf16.msra.mxu0 %v1132
    %1188 = vmatpush.bf16.msra.mxu0 %v1129
    %1189 = vmatpush.bf16.msra.mxu0 %v1126
    %1190 = vmatpush.bf16.msra.mxu0 %v1123
    %1191 = vmatpush.bf16.msra.mxu0 %v1120
    %1192 = vmatpush.bf16.msra.mxu0 %v1117
    %1193 = vmatpush.bf16.msra.mxu0 %v1114
    %1194 = vmatmul.bf16.gmra.mxu0 %v1030
    %v1195 = vpop.f32.mrf.mxu0
    %v1196 = vadd.f32 0.0, %v1195
    %v1197 = vpop.f32.mrf.mxu0
    %1198 = vdwg.mxu0
    %v1199 = vadd.f32 %v948, %v1170
    %v1200 = vadd.f32 %v949, %v1183
    %v1201 = vadd.f32 %v950, %v1196
    %s1202 = scalar_lea.vmem [#allocation7], 768
    %v1203 = vld [vmem:[%s1202] sm:$0xff]
    %v1204 = vld [vmem:[%s1202 + $0x8] sm:$0xf]
    %v1205 = vld [vmem:[%s1202 + $0xc] sm:$0xff]
    %v1206 = vld [vmem:[%s1202 + $0x14] sm:$0xf]
    %v1207 = vld [vmem:[%s1202 + $0x18] sm:$0xff]
    %v1208 = vld [vmem:[%s1202 + $0x20] sm:$0xf]
    %v1209 = vld [vmem:[%s1202 + $0x24] sm:$0xff]
    %v1210 = vld [vmem:[%s1202 + $0x2c] sm:$0xf]
    %v1211 = vld [vmem:[%s1202 + $0x30] sm:$0xff]
    %v1212 = vld [vmem:[%s1202 + $0x38] sm:$0xf]
    %v1213 = vld [vmem:[%s1202 + $0x3c] sm:$0xff]
    %v1214 = vld [vmem:[%s1202 + $0x44] sm:$0xf]
    %v1215 = vld [vmem:[%s1202 + $0x48] sm:$0xff]
    %v1216 = vld [vmem:[%s1202 + $0x50] sm:$0xf]
    %v1217 = vld [vmem:[%s1202 + $0x54] sm:$0xff]
    %v1218 = vld [vmem:[%s1202 + $0x5c] sm:$0xf]
    %v1219 = vld [vmem:[%s1202 + $0x60] sm:$0xff]
    %v1220 = vld [vmem:[%s1202 + $0x68] sm:$0xf]
    %v1221 = vld [vmem:[%s1202 + $0x6c] sm:$0xff]
    %v1222 = vld [vmem:[%s1202 + $0x74] sm:$0xf]
    %v1223 = vld [vmem:[%s1202 + $0x78] sm:$0xff]
    %v1224 = vld [vmem:[%s1202 + $0x80] sm:$0xf]
    %v1225 = vld [vmem:[%s1202 + $0x84] sm:$0xff]
    %v1226 = vld [vmem:[%s1202 + $0x8c] sm:$0xf]
    %v1227 = vld [vmem:[%s1202 + $0x90] sm:$0xff]
    %v1228 = vld [vmem:[%s1202 + $0x98] sm:$0xf]
    %v1229 = vld [vmem:[%s1202 + $0x9c] sm:$0xff]
    %v1230 = vld [vmem:[%s1202 + $0xa4] sm:$0xf]
    %v1231 = vld [vmem:[%s1202 + $0xa8] sm:$0xff]
    %v1232 = vld [vmem:[%s1202 + $0xb0] sm:$0xf]
    %v1233 = vld [vmem:[%s1202 + $0xb4] sm:$0xff]
    %v1234 = vld [vmem:[%s1202 + $0xbc] sm:$0xf]
    %v1235 = vrot.slane %v757, 1
    %v1236 = vsel %vm325, %v758, %v1235
    %v1237 = vrot.slane %v759, 7
    %v1238 = vsel %vm327, %v1237, %v1236
    %v1239 = vrot.slane %v760, 6
    %v1240 = vsel %vm329, %v1239, %v1238
    %v1241 = vrot.slane %v761, 5
    %v1242 = vsel %vm331, %v1241, %v1240
    %v1243 = vrot.slane %v762, 4
    %v1244 = vsel %vm333, %v1243, %v1242
    %v1245 = vrot.slane %v763, 3
    %v1246 = vsel %vm335, %v1245, %v1244
    %v1247 = vrot.slane %v764, 2
    %v1248 = vsel %vm337, %v1247, %v1246
    %v1249 = vpack.c.b16 %v1248, %v1248
    %v1283 = vunpack.c.l.b16 %v1203
    %v1284 = vunpack.c.h.b16 %v1203
    %v1285 = vunpack.c.l.b16 %v1204
    %v1286 = vunpack.c.l.b16 %v1205
    %v1287 = vunpack.c.h.b16 %v1205
    %v1288 = vunpack.c.l.b16 %v1206
    %v1289 = vunpack.c.l.b16 %v1207
    %v1290 = vunpack.c.h.b16 %v1207
    %v1291 = vunpack.c.l.b16 %v1208
    %v1292 = vunpack.c.l.b16 %v1209
    %v1293 = vunpack.c.h.b16 %v1209
    %v1294 = vunpack.c.l.b16 %v1210
    %v1295 = vunpack.c.l.b16 %v1211
    %v1296 = vunpack.c.h.b16 %v1211
    %v1297 = vunpack.c.l.b16 %v1212
    %v1298 = vunpack.c.l.b16 %v1213
    %v1299 = vunpack.c.h.b16 %v1213
    %v1300 = vunpack.c.l.b16 %v1214
    %v1301 = vunpack.c.l.b16 %v1215
    %v1302 = vunpack.c.h.b16 %v1215
    %v1303 = vunpack.c.l.b16 %v1216
    %v1304 = vunpack.c.l.b16 %v1217
    %v1305 = vunpack.c.h.b16 %v1217
    %v1306 = vunpack.c.l.b16 %v1218
    %v1307 = vunpack.c.l.b16 %v1219
    %v1308 = vunpack.c.h.b16 %v1219
    %v1309 = vunpack.c.l.b16 %v1220
    %v1310 = vunpack.c.l.b16 %v1221
    %v1311 = vunpack.c.h.b16 %v1221
    %v1312 = vunpack.c.l.b16 %v1222
    %v1313 = vunpack.c.l.b16 %v1223
    %v1314 = vunpack.c.h.b16 %v1223
    %v1315 = vunpack.c.l.b16 %v1224
    %v1316 = vunpack.c.l.b16 %v1225
    %v1317 = vunpack.c.h.b16 %v1225
    %v1318 = vunpack.c.l.b16 %v1226
    %v1319 = vunpack.c.l.b16 %v1227
    %v1320 = vunpack.c.h.b16 %v1227
    %v1321 = vunpack.c.l.b16 %v1228
    %v1322 = vunpack.c.l.b16 %v1229
    %v1323 = vunpack.c.h.b16 %v1229
    %v1324 = vunpack.c.l.b16 %v1230
    %v1325 = vunpack.c.l.b16 %v1231
    %v1326 = vunpack.c.h.b16 %v1231
    %v1327 = vunpack.c.l.b16 %v1232
    %v1328 = vunpack.c.l.b16 %v1233
    %v1329 = vunpack.c.h.b16 %v1233
    %v1330 = vunpack.c.l.b16 %v1234
    %v1331 = vpack.c.b16 %v1286, %v1283
    %v1332 = vpack.c.b16 %v1287, %v1284
    %v1333 = vpack.c.b16 %v1288, %v1285
    %v1334 = vpack.c.b16 %v1292, %v1289
    %v1335 = vpack.c.b16 %v1293, %v1290
    %v1336 = vpack.c.b16 %v1294, %v1291
    %v1337 = vpack.c.b16 %v1298, %v1295
    %v1338 = vpack.c.b16 %v1299, %v1296
    %v1339 = vpack.c.b16 %v1300, %v1297
    %v1340 = vpack.c.b16 %v1304, %v1301
    %v1341 = vpack.c.b16 %v1305, %v1302
    %v1342 = vpack.c.b16 %v1306, %v1303
    %v1343 = vpack.c.b16 %v1310, %v1307
    %v1344 = vpack.c.b16 %v1311, %v1308
    %v1345 = vpack.c.b16 %v1312, %v1309
    %v1346 = vpack.c.b16 %v1316, %v1313
    %v1347 = vpack.c.b16 %v1317, %v1314
    %v1348 = vpack.c.b16 %v1318, %v1315
    %v1349 = vpack.c.b16 %v1322, %v1319
    %v1350 = vpack.c.b16 %v1323, %v1320
    %v1351 = vpack.c.b16 %v1324, %v1321
    %v1352 = vpack.c.b16 %v1328, %v1325
    %v1353 = vpack.c.b16 %v1329, %v1326
    %v1354 = vpack.c.b16 %v1330, %v1327
    %1379 = vmatpush.bf16.msra.mxu0 %v1352
    %1380 = vmatpush.bf16.msra.mxu0 %v1349
    %1381 = vmatpush.bf16.msra.mxu0 %v1346
    %1382 = vmatpush.bf16.msra.mxu0 %v1343
    %1383 = vmatpush.bf16.msra.mxu0 %v1340
    %1384 = vmatpush.bf16.msra.mxu0 %v1337
    %1385 = vmatpush.bf16.msra.mxu0 %v1334
    %1386 = vmatpush.bf16.msra.mxu0 %v1331
    %1387 = vmatmul.bf16.gmra.mxu0 %v1249
    %v1388 = vpop.f32.mrf.mxu0
    %v1389 = vadd.f32 0.0, %v1388
    %v1390 = vpop.f32.mrf.mxu0
    %1391 = vdwg.mxu0
    %1392 = vmatpush.bf16.msra.mxu0 %v1353
    %1393 = vmatpush.bf16.msra.mxu0 %v1350
    %1394 = vmatpush.bf16.msra.mxu0 %v1347
    %1395 = vmatpush.bf16.msra.mxu0 %v1344
    %1396 = vmatpush.bf16.msra.mxu0 %v1341
    %1397 = vmatpush.bf16.msra.mxu0 %v1338
    %1398 = vmatpush.bf16.msra.mxu0 %v1335
    %1399 = vmatpush.bf16.msra.mxu0 %v1332
    %1400 = vmatmul.bf16.gmra.mxu0 %v1249
    %v1401 = vpop.f32.mrf.mxu0
    %v1402 = vadd.f32 0.0, %v1401
    %v1403 = vpop.f32.mrf.mxu0
    %1404 = vdwg.mxu0
    %1405 = vmatpush.bf16.msra.mxu0 %v1354
    %1406 = vmatpush.bf16.msra.mxu0 %v1351
    %1407 = vmatpush.bf16.msra.mxu0 %v1348
    %1408 = vmatpush.bf16.msra.mxu0 %v1345
    %1409 = vmatpush.bf16.msra.mxu0 %v1342
    %1410 = vmatpush.bf16.msra.mxu0 %v1339
    %1411 = vmatpush.bf16.msra.mxu0 %v1336
    %1412 = vmatpush.bf16.msra.mxu0 %v1333
    %1413 = vmatmul.bf16.gmra.mxu0 %v1249
    %v1414 = vpop.f32.mrf.mxu0
    %v1415 = vadd.f32 0.0, %v1414
    %v1416 = vpop.f32.mrf.mxu0
    %1417 = vdwg.mxu0
    %v1418 = vadd.f32 %v1199, %v1389
    %v1419 = vadd.f32 %v1200, %v1402
    %v1420 = vadd.f32 %v1201, %v1415
    %s1421 = scalar_lea.vmem [#allocation7], 960
    %v1422 = vld [vmem:[%s1421] sm:$0xff]
    %v1423 = vld [vmem:[%s1421 + $0x8] sm:$0xf]
    %v1424 = vld [vmem:[%s1421 + $0xc] sm:$0xff]
    %v1425 = vld [vmem:[%s1421 + $0x14] sm:$0xf]
    %v1426 = vld [vmem:[%s1421 + $0x18] sm:$0xff]
    %v1427 = vld [vmem:[%s1421 + $0x20] sm:$0xf]
    %v1428 = vld [vmem:[%s1421 + $0x24] sm:$0xff]
    %v1429 = vld [vmem:[%s1421 + $0x2c] sm:$0xf]
    %v1430 = vld [vmem:[%s1421 + $0x30] sm:$0xff]
    %v1431 = vld [vmem:[%s1421 + $0x38] sm:$0xf]
    %v1432 = vld [vmem:[%s1421 + $0x3c] sm:$0xff]
    %v1433 = vld [vmem:[%s1421 + $0x44] sm:$0xf]
    %v1434 = vld [vmem:[%s1421 + $0x48] sm:$0xff]
    %v1435 = vld [vmem:[%s1421 + $0x50] sm:$0xf]
    %v1436 = vld [vmem:[%s1421 + $0x54] sm:$0xff]
    %v1437 = vld [vmem:[%s1421 + $0x5c] sm:$0xf]
    %v1438 = vld [vmem:[%s1421 + $0x60] sm:$0xff]
    %v1439 = vld [vmem:[%s1421 + $0x68] sm:$0xf]
    %v1440 = vld [vmem:[%s1421 + $0x6c] sm:$0xff]
    %v1441 = vld [vmem:[%s1421 + $0x74] sm:$0xf]
    %v1442 = vld [vmem:[%s1421 + $0x78] sm:$0xff]
    %v1443 = vld [vmem:[%s1421 + $0x80] sm:$0xf]
    %v1444 = vld [vmem:[%s1421 + $0x84] sm:$0xff]
    %v1445 = vld [vmem:[%s1421 + $0x8c] sm:$0xf]
    %v1446 = vld [vmem:[%s1421 + $0x90] sm:$0xff]
    %v1447 = vld [vmem:[%s1421 + $0x98] sm:$0xf]
    %v1448 = vld [vmem:[%s1421 + $0x9c] sm:$0xff]
    %v1449 = vld [vmem:[%s1421 + $0xa4] sm:$0xf]
    %v1450 = vld [vmem:[%s1421 + $0xa8] sm:$0xff]
    %v1451 = vld [vmem:[%s1421 + $0xb0] sm:$0xf]
    %v1452 = vld [vmem:[%s1421 + $0xb4] sm:$0xff]
    %v1453 = vld [vmem:[%s1421 + $0xbc] sm:$0xf]
    %v1454 = vrot.slane %v1008, 1
    %v1455 = vsel %vm325, %v1009, %v1454
    %v1456 = vrot.slane %v1010, 7
    %v1457 = vsel %vm327, %v1456, %v1455
    %v1458 = vrot.slane %v1011, 6
    %v1459 = vsel %vm329, %v1458, %v1457
    %v1460 = vrot.slane %v1012, 5
    %v1461 = vsel %vm331, %v1460, %v1459
    %v1462 = vrot.slane %v1013, 4
    %v1463 = vsel %vm333, %v1462, %v1461
    %v1464 = vrot.slane %v1014, 3
    %v1465 = vsel %vm335, %v1464, %v1463
    %v1466 = vrot.slane %v1015, 2
    %v1467 = vsel %vm337, %v1466, %v1465
    %v1468 = vpack.c.b16 %v1467, %v1467
    %v1502 = vunpack.c.l.b16 %v1422
    %v1503 = vunpack.c.h.b16 %v1422
    %v1504 = vunpack.c.l.b16 %v1423
    %v1505 = vunpack.c.l.b16 %v1424
    %v1506 = vunpack.c.h.b16 %v1424
    %v1507 = vunpack.c.l.b16 %v1425
    %v1508 = vunpack.c.l.b16 %v1426
    %v1509 = vunpack.c.h.b16 %v1426
    %v1510 = vunpack.c.l.b16 %v1427
    %v1511 = vunpack.c.l.b16 %v1428
    %v1512 = vunpack.c.h.b16 %v1428
    %v1513 = vunpack.c.l.b16 %v1429
    %v1514 = vunpack.c.l.b16 %v1430
    %v1515 = vunpack.c.h.b16 %v1430
    %v1516 = vunpack.c.l.b16 %v1431
    %v1517 = vunpack.c.l.b16 %v1432
    %v1518 = vunpack.c.h.b16 %v1432
    %v1519 = vunpack.c.l.b16 %v1433
    %v1520 = vunpack.c.l.b16 %v1434
    %v1521 = vunpack.c.h.b16 %v1434
    %v1522 = vunpack.c.l.b16 %v1435
    %v1523 = vunpack.c.l.b16 %v1436
    %v1524 = vunpack.c.h.b16 %v1436
    %v1525 = vunpack.c.l.b16 %v1437
    %v1526 = vunpack.c.l.b16 %v1438
    %v1527 = vunpack.c.h.b16 %v1438
    %v1528 = vunpack.c.l.b16 %v1439
    %v1529 = vunpack.c.l.b16 %v1440
    %v1530 = vunpack.c.h.b16 %v1440
    %v1531 = vunpack.c.l.b16 %v1441
    %v1532 = vunpack.c.l.b16 %v1442
    %v1533 = vunpack.c.h.b16 %v1442
    %v1534 = vunpack.c.l.b16 %v1443
    %v1535 = vunpack.c.l.b16 %v1444
    %v1536 = vunpack.c.h.b16 %v1444
    %v1537 = vunpack.c.l.b16 %v1445
    %v1538 = vunpack.c.l.b16 %v1446
    %v1539 = vunpack.c.h.b16 %v1446
    %v1540 = vunpack.c.l.b16 %v1447
    %v1541 = vunpack.c.l.b16 %v1448
    %v1542 = vunpack.c.h.b16 %v1448
    %v1543 = vunpack.c.l.b16 %v1449
    %v1544 = vunpack.c.l.b16 %v1450
    %v1545 = vunpack.c.h.b16 %v1450
    %v1546 = vunpack.c.l.b16 %v1451
    %v1547 = vunpack.c.l.b16 %v1452
    %v1548 = vunpack.c.h.b16 %v1452
    %v1549 = vunpack.c.l.b16 %v1453
    %v1550 = vpack.c.b16 %v1505, %v1502
    %v1551 = vpack.c.b16 %v1506, %v1503
    %v1552 = vpack.c.b16 %v1507, %v1504
    %v1553 = vpack.c.b16 %v1511, %v1508
    %v1554 = vpack.c.b16 %v1512, %v1509
    %v1555 = vpack.c.b16 %v1513, %v1510
    %v1556 = vpack.c.b16 %v1517, %v1514
    %v1557 = vpack.c.b16 %v1518, %v1515
    %v1558 = vpack.c.b16 %v1519, %v1516
    %v1559 = vpack.c.b16 %v1523, %v1520
    %v1560 = vpack.c.b16 %v1524, %v1521
    %v1561 = vpack.c.b16 %v1525, %v1522
    %v1562 = vpack.c.b16 %v1529, %v1526
    %v1563 = vpack.c.b16 %v1530, %v1527
    %v1564 = vpack.c.b16 %v1531, %v1528
    %v1565 = vpack.c.b16 %v1535, %v1532
    %v1566 = vpack.c.b16 %v1536, %v1533
    %v1567 = vpack.c.b16 %v1537, %v1534
    %v1568 = vpack.c.b16 %v1541, %v1538
    %v1569 = vpack.c.b16 %v1542, %v1539
    %v1570 = vpack.c.b16 %v1543, %v1540
    %v1571 = vpack.c.b16 %v1547, %v1544
    %v1572 = vpack.c.b16 %v1548, %v1545
    %v1573 = vpack.c.b16 %v1549, %v1546
    %1598 = vmatpush.bf16.msra.mxu0 %v1571
    %1599 = vmatpush.bf16.msra.mxu0 %v1568
    %1600 = vmatpush.bf16.msra.mxu0 %v1565
    %1601 = vmatpush.bf16.msra.mxu0 %v1562
    %1602 = vmatpush.bf16.msra.mxu0 %v1559
    %1603 = vmatpush.bf16.msra.mxu0 %v1556
    %1604 = vmatpush.bf16.msra.mxu0 %v1553
    %1605 = vmatpush.bf16.msra.mxu0 %v1550
    %1606 = vmatmul.bf16.gmra.mxu0 %v1468
    %v1607 = vpop.f32.mrf.mxu0
    %v1608 = vadd.f32 0.0, %v1607
    %v1609 = vpop.f32.mrf.mxu0
    %1610 = vdwg.mxu0
    %1611 = vmatpush.bf16.msra.mxu0 %v1572
    %1612 = vmatpush.bf16.msra.mxu0 %v1569
    %1613 = vmatpush.bf16.msra.mxu0 %v1566
    %1614 = vmatpush.bf16.msra.mxu0 %v1563
    %1615 = vmatpush.bf16.msra.mxu0 %v1560
    %1616 = vmatpush.bf16.msra.mxu0 %v1557
    %1617 = vmatpush.bf16.msra.mxu0 %v1554
    %1618 = vmatpush.bf16.msra.mxu0 %v1551
    %1619 = vmatmul.bf16.gmra.mxu0 %v1468
    %v1620 = vpop.f32.mrf.mxu0
    %v1621 = vadd.f32 0.0, %v1620
    %v1622 = vpop.f32.mrf.mxu0
    %1623 = vdwg.mxu0
    %1624 = vmatpush.bf16.msra.mxu0 %v1573
    %1625 = vmatpush.bf16.msra.mxu0 %v1570
    %1626 = vmatpush.bf16.msra.mxu0 %v1567
    %1627 = vmatpush.bf16.msra.mxu0 %v1564
    %1628 = vmatpush.bf16.msra.mxu0 %v1561
    %1629 = vmatpush.bf16.msra.mxu0 %v1558
    %1630 = vmatpush.bf16.msra.mxu0 %v1555
    %1631 = vmatpush.bf16.msra.mxu0 %v1552
    %1632 = vmatmul.bf16.gmra.mxu0 %v1468
    %v1633 = vpop.f32.mrf.mxu0
    %v1634 = vadd.f32 0.0, %v1633
    %v1635 = vpop.f32.mrf.mxu0
    %1636 = vdwg.mxu0
    %v1637 = vadd.f32 %v1418, %v1608
    %v1638 = vadd.f32 %v1419, %v1621
    %v1639 = vadd.f32 %v1420, %v1634
    %s1640 = scalar_lea.vmem [#allocation7], 1152
    %v1641 = vld [vmem:[%s1640] sm:$0xff]
    %v1642 = vld [vmem:[%s1640 + $0x8] sm:$0xf]
    %v1643 = vld [vmem:[%s1640 + $0xc] sm:$0xff]
    %v1644 = vld [vmem:[%s1640 + $0x14] sm:$0xf]
    %v1645 = vld [vmem:[%s1640 + $0x18] sm:$0xff]
    %v1646 = vld [vmem:[%s1640 + $0x20] sm:$0xf]
    %v1647 = vld [vmem:[%s1640 + $0x24] sm:$0xff]
    %v1648 = vld [vmem:[%s1640 + $0x2c] sm:$0xf]
    %v1649 = vld [vmem:[%s1640 + $0x30] sm:$0xff]
    %v1650 = vld [vmem:[%s1640 + $0x38] sm:$0xf]
    %v1651 = vld [vmem:[%s1640 + $0x3c] sm:$0xff]
    %v1652 = vld [vmem:[%s1640 + $0x44] sm:$0xf]
    %v1653 = vld [vmem:[%s1640 + $0x48] sm:$0xff]
    %v1654 = vld [vmem:[%s1640 + $0x50] sm:$0xf]
    %v1655 = vld [vmem:[%s1640 + $0x54] sm:$0xff]
    %v1656 = vld [vmem:[%s1640 + $0x5c] sm:$0xf]
    %v1657 = vld [vmem:[%s1640 + $0x60] sm:$0xff]
    %v1658 = vld [vmem:[%s1640 + $0x68] sm:$0xf]
    %v1659 = vld [vmem:[%s1640 + $0x6c] sm:$0xff]
    %v1660 = vld [vmem:[%s1640 + $0x74] sm:$0xf]
    %v1661 = vld [vmem:[%s1640 + $0x78] sm:$0xff]
    %v1662 = vld [vmem:[%s1640 + $0x80] sm:$0xf]
    %v1663 = vld [vmem:[%s1640 + $0x84] sm:$0xff]
    %v1664 = vld [vmem:[%s1640 + $0x8c] sm:$0xf]
    %v1665 = vld [vmem:[%s1640 + $0x90] sm:$0xff]
    %v1666 = vld [vmem:[%s1640 + $0x98] sm:$0xf]
    %v1667 = vld [vmem:[%s1640 + $0x9c] sm:$0xff]
    %v1668 = vld [vmem:[%s1640 + $0xa4] sm:$0xf]
    %v1669 = vld [vmem:[%s1640 + $0xa8] sm:$0xff]
    %v1670 = vld [vmem:[%s1640 + $0xb0] sm:$0xf]
    %v1671 = vld [vmem:[%s1640 + $0xb4] sm:$0xff]
    %v1672 = vld [vmem:[%s1640 + $0xbc] sm:$0xf]
    %v1673 = vrot.slane %v757, 7
    %v1674 = vrot.slane %v758, 6
    %v1675 = vsel %vm325, %v1674, %v1673
    %v1676 = vrot.slane %v759, 5
    %v1677 = vsel %vm327, %v1676, %v1675
    %v1678 = vrot.slane %v760, 4
    %v1679 = vsel %vm329, %v1678, %v1677
    %v1680 = vrot.slane %v761, 3
    %v1681 = vsel %vm331, %v1680, %v1679
    %v1682 = vrot.slane %v762, 2
    %v1683 = vsel %vm333, %v1682, %v1681
    %v1684 = vrot.slane %v763, 1
    %v1685 = vsel %vm335, %v1684, %v1683
    %v1686 = vsel %vm337, %v764, %v1685
    %v1687 = vpack.c.b16 %v1686, %v1686
    %v1721 = vunpack.c.l.b16 %v1641
    %v1722 = vunpack.c.h.b16 %v1641
    %v1723 = vunpack.c.l.b16 %v1642
    %v1724 = vunpack.c.l.b16 %v1643
    %v1725 = vunpack.c.h.b16 %v1643
    %v1726 = vunpack.c.l.b16 %v1644
    %v1727 = vunpack.c.l.b16 %v1645
    %v1728 = vunpack.c.h.b16 %v1645
    %v1729 = vunpack.c.l.b16 %v1646
    %v1730 = vunpack.c.l.b16 %v1647
    %v1731 = vunpack.c.h.b16 %v1647
    %v1732 = vunpack.c.l.b16 %v1648
    %v1733 = vunpack.c.l.b16 %v1649
    %v1734 = vunpack.c.h.b16 %v1649
    %v1735 = vunpack.c.l.b16 %v1650
    %v1736 = vunpack.c.l.b16 %v1651
    %v1737 = vunpack.c.h.b16 %v1651
    %v1738 = vunpack.c.l.b16 %v1652
    %v1739 = vunpack.c.l.b16 %v1653
    %v1740 = vunpack.c.h.b16 %v1653
    %v1741 = vunpack.c.l.b16 %v1654
    %v1742 = vunpack.c.l.b16 %v1655
    %v1743 = vunpack.c.h.b16 %v1655
    %v1744 = vunpack.c.l.b16 %v1656
    %v1745 = vunpack.c.l.b16 %v1657
    %v1746 = vunpack.c.h.b16 %v1657
    %v1747 = vunpack.c.l.b16 %v1658
    %v1748 = vunpack.c.l.b16 %v1659
    %v1749 = vunpack.c.h.b16 %v1659
    %v1750 = vunpack.c.l.b16 %v1660
    %v1751 = vunpack.c.l.b16 %v1661
    %v1752 = vunpack.c.h.b16 %v1661
    %v1753 = vunpack.c.l.b16 %v1662
    %v1754 = vunpack.c.l.b16 %v1663
    %v1755 = vunpack.c.h.b16 %v1663
    %v1756 = vunpack.c.l.b16 %v1664
    %v1757 = vunpack.c.l.b16 %v1665
    %v1758 = vunpack.c.h.b16 %v1665
    %v1759 = vunpack.c.l.b16 %v1666
    %v1760 = vunpack.c.l.b16 %v1667
    %v1761 = vunpack.c.h.b16 %v1667
    %v1762 = vunpack.c.l.b16 %v1668
    %v1763 = vunpack.c.l.b16 %v1669
    %v1764 = vunpack.c.h.b16 %v1669
    %v1765 = vunpack.c.l.b16 %v1670
    %v1766 = vunpack.c.l.b16 %v1671
    %v1767 = vunpack.c.h.b16 %v1671
    %v1768 = vunpack.c.l.b16 %v1672
    %v1769 = vpack.c.b16 %v1724, %v1721
    %v1770 = vpack.c.b16 %v1725, %v1722
    %v1771 = vpack.c.b16 %v1726, %v1723
    %v1772 = vpack.c.b16 %v1730, %v1727
    %v1773 = vpack.c.b16 %v1731, %v1728
    %v1774 = vpack.c.b16 %v1732, %v1729
    %v1775 = vpack.c.b16 %v1736, %v1733
    %v1776 = vpack.c.b16 %v1737, %v1734
    %v1777 = vpack.c.b16 %v1738, %v1735
    %v1778 = vpack.c.b16 %v1742, %v1739
    %v1779 = vpack.c.b16 %v1743, %v1740
    %v1780 = vpack.c.b16 %v1744, %v1741
    %v1781 = vpack.c.b16 %v1748, %v1745
    %v1782 = vpack.c.b16 %v1749, %v1746
    %v1783 = vpack.c.b16 %v1750, %v1747
    %v1784 = vpack.c.b16 %v1754, %v1751
    %v1785 = vpack.c.b16 %v1755, %v1752
    %v1786 = vpack.c.b16 %v1756, %v1753
    %v1787 = vpack.c.b16 %v1760, %v1757
    %v1788 = vpack.c.b16 %v1761, %v1758
    %v1789 = vpack.c.b16 %v1762, %v1759
    %v1790 = vpack.c.b16 %v1766, %v1763
    %v1791 = vpack.c.b16 %v1767, %v1764
    %v1792 = vpack.c.b16 %v1768, %v1765
    %1817 = vmatpush.bf16.msra.mxu0 %v1790
    %1818 = vmatpush.bf16.msra.mxu0 %v1787
    %1819 = vmatpush.bf16.msra.mxu0 %v1784
    %1820 = vmatpush.bf16.msra.mxu0 %v1781
    %1821 = vmatpush.bf16.msra.mxu0 %v1778
    %1822 = vmatpush.bf16.msra.mxu0 %v1775
    %1823 = vmatpush.bf16.msra.mxu0 %v1772
    %1824 = vmatpush.bf16.msra.mxu0 %v1769
    %1825 = vmatmul.bf16.gmra.mxu0 %v1687
    %v1826 = vpop.f32.mrf.mxu0
    %v1827 = vadd.f32 0.0, %v1826
    %v1828 = vpop.f32.mrf.mxu0
    %1829 = vdwg.mxu0
    %1830 = vmatpush.bf16.msra.mxu0 %v1791
    %1831 = vmatpush.bf16.msra.mxu0 %v1788
    %1832 = vmatpush.bf16.msra.mxu0 %v1785
    %1833 = vmatpush.bf16.msra.mxu0 %v1782
    %1834 = vmatpush.bf16.msra.mxu0 %v1779
    %1835 = vmatpush.bf16.msra.mxu0 %v1776
    %1836 = vmatpush.bf16.msra.mxu0 %v1773
    %1837 = vmatpush.bf16.msra.mxu0 %v1770
    %1838 = vmatmul.bf16.gmra.mxu0 %v1687
    %v1839 = vpop.f32.mrf.mxu0
    %v1840 = vadd.f32 0.0, %v1839
    %v1841 = vpop.f32.mrf.mxu0
    %1842 = vdwg.mxu0
    %1843 = vmatpush.bf16.msra.mxu0 %v1792
    %1844 = vmatpush.bf16.msra.mxu0 %v1789
    %1845 = vmatpush.bf16.msra.mxu0 %v1786
    %1846 = vmatpush.bf16.msra.mxu0 %v1783
    %1847 = vmatpush.bf16.msra.mxu0 %v1780
    %1848 = vmatpush.bf16.msra.mxu0 %v1777
    %1849 = vmatpush.bf16.msra.mxu0 %v1774
    %1850 = vmatpush.bf16.msra.mxu0 %v1771
    %1851 = vmatmul.bf16.gmra.mxu0 %v1687
    %v1852 = vpop.f32.mrf.mxu0
    %v1853 = vadd.f32 0.0, %v1852
    %v1854 = vpop.f32.mrf.mxu0
    %1855 = vdwg.mxu0
    %v1856 = vadd.f32 %v1637, %v1827
    %v1857 = vadd.f32 %v1638, %v1840
    %v1858 = vadd.f32 %v1639, %v1853
    %s1859 = scalar_lea.vmem [#allocation7], 1344
    %v1860 = vld [vmem:[%s1859] sm:$0xff]
    %v1861 = vld [vmem:[%s1859 + $0x8] sm:$0xf]
    %v1862 = vld [vmem:[%s1859 + $0xc] sm:$0xff]
    %v1863 = vld [vmem:[%s1859 + $0x14] sm:$0xf]
    %v1864 = vld [vmem:[%s1859 + $0x18] sm:$0xff]
    %v1865 = vld [vmem:[%s1859 + $0x20] sm:$0xf]
    %v1866 = vld [vmem:[%s1859 + $0x24] sm:$0xff]
    %v1867 = vld [vmem:[%s1859 + $0x2c] sm:$0xf]
    %v1868 = vld [vmem:[%s1859 + $0x30] sm:$0xff]
    %v1869 = vld [vmem:[%s1859 + $0x38] sm:$0xf]
    %v1870 = vld [vmem:[%s1859 + $0x3c] sm:$0xff]
    %v1871 = vld [vmem:[%s1859 + $0x44] sm:$0xf]
    %v1872 = vld [vmem:[%s1859 + $0x48] sm:$0xff]
    %v1873 = vld [vmem:[%s1859 + $0x50] sm:$0xf]
    %v1874 = vld [vmem:[%s1859 + $0x54] sm:$0xff]
    %v1875 = vld [vmem:[%s1859 + $0x5c] sm:$0xf]
    %v1876 = vld [vmem:[%s1859 + $0x60] sm:$0xff]
    %v1877 = vld [vmem:[%s1859 + $0x68] sm:$0xf]
    %v1878 = vld [vmem:[%s1859 + $0x6c] sm:$0xff]
    %v1879 = vld [vmem:[%s1859 + $0x74] sm:$0xf]
    %v1880 = vld [vmem:[%s1859 + $0x78] sm:$0xff]
    %v1881 = vld [vmem:[%s1859 + $0x80] sm:$0xf]
    %v1882 = vld [vmem:[%s1859 + $0x84] sm:$0xff]
    %v1883 = vld [vmem:[%s1859 + $0x8c] sm:$0xf]
    %v1884 = vld [vmem:[%s1859 + $0x90] sm:$0xff]
    %v1885 = vld [vmem:[%s1859 + $0x98] sm:$0xf]
    %v1886 = vld [vmem:[%s1859 + $0x9c] sm:$0xff]
    %v1887 = vld [vmem:[%s1859 + $0xa4] sm:$0xf]
    %v1888 = vld [vmem:[%s1859 + $0xa8] sm:$0xff]
    %v1889 = vld [vmem:[%s1859 + $0xb0] sm:$0xf]
    %v1890 = vld [vmem:[%s1859 + $0xb4] sm:$0xff]
    %v1891 = vld [vmem:[%s1859 + $0xbc] sm:$0xf]
    %v1892 = vrot.slane %v1008, 7
    %v1893 = vrot.slane %v1009, 6
    %v1894 = vsel %vm325, %v1893, %v1892
    %v1895 = vrot.slane %v1010, 5
    %v1896 = vsel %vm327, %v1895, %v1894
    %v1897 = vrot.slane %v1011, 4
    %v1898 = vsel %vm329, %v1897, %v1896
    %v1899 = vrot.slane %v1012, 3
    %v1900 = vsel %vm331, %v1899, %v1898
    %v1901 = vrot.slane %v1013, 2
    %v1902 = vsel %vm333, %v1901, %v1900
    %v1903 = vrot.slane %v1014, 1
    %v1904 = vsel %vm335, %v1903, %v1902
    %v1905 = vsel %vm337, %v1015, %v1904
    %v1906 = vpack.c.b16 %v1905, %v1905
    %v1940 = vunpack.c.l.b16 %v1860
    %v1941 = vunpack.c.h.b16 %v1860
    %v1942 = vunpack.c.l.b16 %v1861
    %v1943 = vunpack.c.l.b16 %v1862
    %v1944 = vunpack.c.h.b16 %v1862
    %v1945 = vunpack.c.l.b16 %v1863
    %v1946 = vunpack.c.l.b16 %v1864
    %v1947 = vunpack.c.h.b16 %v1864
    %v1948 = vunpack.c.l.b16 %v1865
    %v1949 = vunpack.c.l.b16 %v1866
    %v1950 = vunpack.c.h.b16 %v1866
    %v1951 = vunpack.c.l.b16 %v1867
    %v1952 = vunpack.c.l.b16 %v1868
    %v1953 = vunpack.c.h.b16 %v1868
    %v1954 = vunpack.c.l.b16 %v1869
    %v1955 = vunpack.c.l.b16 %v1870
    %v1956 = vunpack.c.h.b16 %v1870
    %v1957 = vunpack.c.l.b16 %v1871
    %v1958 = vunpack.c.l.b16 %v1872
    %v1959 = vunpack.c.h.b16 %v1872
    %v1960 = vunpack.c.l.b16 %v1873
    %v1961 = vunpack.c.l.b16 %v1874
    %v1962 = vunpack.c.h.b16 %v1874
    %v1963 = vunpack.c.l.b16 %v1875
    %v1964 = vunpack.c.l.b16 %v1876
    %v1965 = vunpack.c.h.b16 %v1876
    %v1966 = vunpack.c.l.b16 %v1877
    %v1967 = vunpack.c.l.b16 %v1878
    %v1968 = vunpack.c.h.b16 %v1878
    %v1969 = vunpack.c.l.b16 %v1879
    %v1970 = vunpack.c.l.b16 %v1880
    %v1971 = vunpack.c.h.b16 %v1880
    %v1972 = vunpack.c.l.b16 %v1881
    %v1973 = vunpack.c.l.b16 %v1882
    %v1974 = vunpack.c.h.b16 %v1882
    %v1975 = vunpack.c.l.b16 %v1883
    %v1976 = vunpack.c.l.b16 %v1884
    %v1977 = vunpack.c.h.b16 %v1884
    %v1978 = vunpack.c.l.b16 %v1885
    %v1979 = vunpack.c.l.b16 %v1886
    %v1980 = vunpack.c.h.b16 %v1886
    %v1981 = vunpack.c.l.b16 %v1887
    %v1982 = vunpack.c.l.b16 %v1888
    %v1983 = vunpack.c.h.b16 %v1888
    %v1984 = vunpack.c.l.b16 %v1889
    %v1985 = vunpack.c.l.b16 %v1890
    %v1986 = vunpack.c.h.b16 %v1890
    %v1987 = vunpack.c.l.b16 %v1891
    %v1988 = vpack.c.b16 %v1943, %v1940
    %v1989 = vpack.c.b16 %v1944, %v1941
    %v1990 = vpack.c.b16 %v1945, %v1942
    %v1991 = vpack.c.b16 %v1949, %v1946
    %v1992 = vpack.c.b16 %v1950, %v1947
    %v1993 = vpack.c.b16 %v1951, %v1948
    %v1994 = vpack.c.b16 %v1955, %v1952
    %v1995 = vpack.c.b16 %v1956, %v1953
    %v1996 = vpack.c.b16 %v1957, %v1954
    %v1997 = vpack.c.b16 %v1961, %v1958
    %v1998 = vpack.c.b16 %v1962, %v1959
    %v1999 = vpack.c.b16 %v1963, %v1960
    %v2000 = vpack.c.b16 %v1967, %v1964
    %v2001 = vpack.c.b16 %v1968, %v1965
    %v2002 = vpack.c.b16 %v1969, %v1966
    %v2003 = vpack.c.b16 %v1973, %v1970
    %v2004 = vpack.c.b16 %v1974, %v1971
    %v2005 = vpack.c.b16 %v1975, %v1972
    %v2006 = vpack.c.b16 %v1979, %v1976
    %v2007 = vpack.c.b16 %v1980, %v1977
    %v2008 = vpack.c.b16 %v1981, %v1978
    %v2009 = vpack.c.b16 %v1985, %v1982
    %v2010 = vpack.c.b16 %v1986, %v1983
    %v2011 = vpack.c.b16 %v1987, %v1984
    %2036 = vmatpush.bf16.msra.mxu0 %v2009
    %2037 = vmatpush.bf16.msra.mxu0 %v2006
    %2038 = vmatpush.bf16.msra.mxu0 %v2003
    %2039 = vmatpush.bf16.msra.mxu0 %v2000
    %2040 = vmatpush.bf16.msra.mxu0 %v1997
    %2041 = vmatpush.bf16.msra.mxu0 %v1994
    %2042 = vmatpush.bf16.msra.mxu0 %v1991
    %2043 = vmatpush.bf16.msra.mxu0 %v1988
    %2044 = vmatmul.bf16.gmra.mxu0 %v1906
    %v2045 = vpop.f32.mrf.mxu0
    %v2046 = vadd.f32 0.0, %v2045
    %v2047 = vpop.f32.mrf.mxu0
    %2048 = vdwg.mxu0
    %2049 = vmatpush.bf16.msra.mxu0 %v2010
    %2050 = vmatpush.bf16.msra.mxu0 %v2007
    %2051 = vmatpush.bf16.msra.mxu0 %v2004
    %2052 = vmatpush.bf16.msra.mxu0 %v2001
    %2053 = vmatpush.bf16.msra.mxu0 %v1998
    %2054 = vmatpush.bf16.msra.mxu0 %v1995
    %2055 = vmatpush.bf16.msra.mxu0 %v1992
    %2056 = vmatpush.bf16.msra.mxu0 %v1989
    %2057 = vmatmul.bf16.gmra.mxu0 %v1906
    %v2058 = vpop.f32.mrf.mxu0
    %v2059 = vadd.f32 0.0, %v2058
    %v2060 = vpop.f32.mrf.mxu0
    %2061 = vdwg.mxu0
    %2062 = vmatpush.bf16.msra.mxu0 %v2011
    %2063 = vmatpush.bf16.msra.mxu0 %v2008
    %2064 = vmatpush.bf16.msra.mxu0 %v2005
    %2065 = vmatpush.bf16.msra.mxu0 %v2002
    %2066 = vmatpush.bf16.msra.mxu0 %v1999
    %2067 = vmatpush.bf16.msra.mxu0 %v1996
    %2068 = vmatpush.bf16.msra.mxu0 %v1993
    %2069 = vmatpush.bf16.msra.mxu0 %v1990
    %2070 = vmatmul.bf16.gmra.mxu0 %v1906
    %v2071 = vpop.f32.mrf.mxu0
    %v2072 = vadd.f32 0.0, %v2071
    %v2073 = vpop.f32.mrf.mxu0
    %2074 = vdwg.mxu0
    %v2075 = vadd.f32 %v1856, %v2046
    %v2076 = vadd.f32 %v1857, %v2059
    %v2077 = vadd.f32 %v1858, %v2072
    %s2078 = scalar_lea.vmem [#allocation7], 1536
    %v2079 = vld [vmem:[%s2078] sm:$0xff]
    %v2080 = vld [vmem:[%s2078 + $0x8] sm:$0xf]
    %v2081 = vld [vmem:[%s2078 + $0xc] sm:$0xff]
    %v2082 = vld [vmem:[%s2078 + $0x14] sm:$0xf]
    %v2083 = vld [vmem:[%s2078 + $0x18] sm:$0xff]
    %v2084 = vld [vmem:[%s2078 + $0x20] sm:$0xf]
    %v2085 = vld [vmem:[%s2078 + $0x24] sm:$0xff]
    %v2086 = vld [vmem:[%s2078 + $0x2c] sm:$0xf]
    %v2087 = vld [vmem:[%s2078 + $0x30] sm:$0xff]
    %v2088 = vld [vmem:[%s2078 + $0x38] sm:$0xf]
    %v2089 = vld [vmem:[%s2078 + $0x3c] sm:$0xff]
    %v2090 = vld [vmem:[%s2078 + $0x44] sm:$0xf]
    %v2091 = vld [vmem:[%s2078 + $0x48] sm:$0xff]
    %v2092 = vld [vmem:[%s2078 + $0x50] sm:$0xf]
    %v2093 = vld [vmem:[%s2078 + $0x54] sm:$0xff]
    %v2094 = vld [vmem:[%s2078 + $0x5c] sm:$0xf]
    %v2095 = vld [vmem:[%s2078 + $0x60] sm:$0xff]
    %v2096 = vld [vmem:[%s2078 + $0x68] sm:$0xf]
    %v2097 = vld [vmem:[%s2078 + $0x6c] sm:$0xff]
    %v2098 = vld [vmem:[%s2078 + $0x74] sm:$0xf]
    %v2099 = vld [vmem:[%s2078 + $0x78] sm:$0xff]
    %v2100 = vld [vmem:[%s2078 + $0x80] sm:$0xf]
    %v2101 = vld [vmem:[%s2078 + $0x84] sm:$0xff]
    %v2102 = vld [vmem:[%s2078 + $0x8c] sm:$0xf]
    %v2103 = vld [vmem:[%s2078 + $0x90] sm:$0xff]
    %v2104 = vld [vmem:[%s2078 + $0x98] sm:$0xf]
    %v2105 = vld [vmem:[%s2078 + $0x9c] sm:$0xff]
    %v2106 = vld [vmem:[%s2078 + $0xa4] sm:$0xf]
    %v2107 = vld [vmem:[%s2078 + $0xa8] sm:$0xff]
    %v2108 = vld [vmem:[%s2078 + $0xb0] sm:$0xf]
    %v2109 = vld [vmem:[%s2078 + $0xb4] sm:$0xff]
    %v2110 = vld [vmem:[%s2078 + $0xbc] sm:$0xf]
    %v2111 = vrot.slane %v757, 6
    %v2112 = vrot.slane %v758, 5
    %v2113 = vsel %vm325, %v2112, %v2111
    %v2114 = vrot.slane %v759, 4
    %v2115 = vsel %vm327, %v2114, %v2113
    %v2116 = vrot.slane %v760, 3
    %v2117 = vsel %vm329, %v2116, %v2115
    %v2118 = vrot.slane %v761, 2
    %v2119 = vsel %vm331, %v2118, %v2117
    %v2120 = vrot.slane %v762, 1
    %v2121 = vsel %vm333, %v2120, %v2119
    %v2122 = vsel %vm335, %v763, %v2121
    %v2123 = vrot.slane %v764, 7
    %v2124 = vsel %vm337, %v2123, %v2122
    %v2125 = vpack.c.b16 %v2124, %v2124
    %v2159 = vunpack.c.l.b16 %v2079
    %v2160 = vunpack.c.h.b16 %v2079
    %v2161 = vunpack.c.l.b16 %v2080
    %v2162 = vunpack.c.l.b16 %v2081
    %v2163 = vunpack.c.h.b16 %v2081
    %v2164 = vunpack.c.l.b16 %v2082
    %v2165 = vunpack.c.l.b16 %v2083
    %v2166 = vunpack.c.h.b16 %v2083
    %v2167 = vunpack.c.l.b16 %v2084
    %v2168 = vunpack.c.l.b16 %v2085
    %v2169 = vunpack.c.h.b16 %v2085
    %v2170 = vunpack.c.l.b16 %v2086
    %v2171 = vunpack.c.l.b16 %v2087
    %v2172 = vunpack.c.h.b16 %v2087
    %v2173 = vunpack.c.l.b16 %v2088
    %v2174 = vunpack.c.l.b16 %v2089
    %v2175 = vunpack.c.h.b16 %v2089
    %v2176 = vunpack.c.l.b16 %v2090
    %v2177 = vunpack.c.l.b16 %v2091
    %v2178 = vunpack.c.h.b16 %v2091
    %v2179 = vunpack.c.l.b16 %v2092
    %v2180 = vunpack.c.l.b16 %v2093
    %v2181 = vunpack.c.h.b16 %v2093
    %v2182 = vunpack.c.l.b16 %v2094
    %v2183 = vunpack.c.l.b16 %v2095
    %v2184 = vunpack.c.h.b16 %v2095
    %v2185 = vunpack.c.l.b16 %v2096
    %v2186 = vunpack.c.l.b16 %v2097
    %v2187 = vunpack.c.h.b16 %v2097
    %v2188 = vunpack.c.l.b16 %v2098
    %v2189 = vunpack.c.l.b16 %v2099
    %v2190 = vunpack.c.h.b16 %v2099
    %v2191 = vunpack.c.l.b16 %v2100
    %v2192 = vunpack.c.l.b16 %v2101
    %v2193 = vunpack.c.h.b16 %v2101
    %v2194 = vunpack.c.l.b16 %v2102
    %v2195 = vunpack.c.l.b16 %v2103
    %v2196 = vunpack.c.h.b16 %v2103
    %v2197 = vunpack.c.l.b16 %v2104
    %v2198 = vunpack.c.l.b16 %v2105
    %v2199 = vunpack.c.h.b16 %v2105
    %v2200 = vunpack.c.l.b16 %v2106
    %v2201 = vunpack.c.l.b16 %v2107
    %v2202 = vunpack.c.h.b16 %v2107
    %v2203 = vunpack.c.l.b16 %v2108
    %v2204 = vunpack.c.l.b16 %v2109
    %v2205 = vunpack.c.h.b16 %v2109
    %v2206 = vunpack.c.l.b16 %v2110
    %v2207 = vpack.c.b16 %v2162, %v2159
    %v2208 = vpack.c.b16 %v2163, %v2160
    %v2209 = vpack.c.b16 %v2164, %v2161
    %v2210 = vpack.c.b16 %v2168, %v2165
    %v2211 = vpack.c.b16 %v2169, %v2166
    %v2212 = vpack.c.b16 %v2170, %v2167
    %v2213 = vpack.c.b16 %v2174, %v2171
    %v2214 = vpack.c.b16 %v2175, %v2172
    %v2215 = vpack.c.b16 %v2176, %v2173
    %v2216 = vpack.c.b16 %v2180, %v2177
    %v2217 = vpack.c.b16 %v2181, %v2178
    %v2218 = vpack.c.b16 %v2182, %v2179
    %v2219 = vpack.c.b16 %v2186, %v2183
    %v2220 = vpack.c.b16 %v2187, %v2184
    %v2221 = vpack.c.b16 %v2188, %v2185
    %v2222 = vpack.c.b16 %v2192, %v2189
    %v2223 = vpack.c.b16 %v2193, %v2190
    %v2224 = vpack.c.b16 %v2194, %v2191
    %v2225 = vpack.c.b16 %v2198, %v2195
    %v2226 = vpack.c.b16 %v2199, %v2196
    %v2227 = vpack.c.b16 %v2200, %v2197
    %v2228 = vpack.c.b16 %v2204, %v2201
    %v2229 = vpack.c.b16 %v2205, %v2202
    %v2230 = vpack.c.b16 %v2206, %v2203
    %2255 = vmatpush.bf16.msra.mxu0 %v2228
    %2256 = vmatpush.bf16.msra.mxu0 %v2225
    %2257 = vmatpush.bf16.msra.mxu0 %v2222
    %2258 = vmatpush.bf16.msra.mxu0 %v2219
    %2259 = vmatpush.bf16.msra.mxu0 %v2216
    %2260 = vmatpush.bf16.msra.mxu0 %v2213
    %2261 = vmatpush.bf16.msra.mxu0 %v2210
    %2262 = vmatpush.bf16.msra.mxu0 %v2207
    %2263 = vmatmul.bf16.gmra.mxu0 %v2125
    %v2264 = vpop.f32.mrf.mxu0
    %v2265 = vadd.f32 0.0, %v2264
    %v2266 = vpop.f32.mrf.mxu0
    %2267 = vdwg.mxu0
    %2268 = vmatpush.bf16.msra.mxu0 %v2229
    %2269 = vmatpush.bf16.msra.mxu0 %v2226
    %2270 = vmatpush.bf16.msra.mxu0 %v2223
    %2271 = vmatpush.bf16.msra.mxu0 %v2220
    %2272 = vmatpush.bf16.msra.mxu0 %v2217
    %2273 = vmatpush.bf16.msra.mxu0 %v2214
    %2274 = vmatpush.bf16.msra.mxu0 %v2211
    %2275 = vmatpush.bf16.msra.mxu0 %v2208
    %2276 = vmatmul.bf16.gmra.mxu0 %v2125
    %v2277 = vpop.f32.mrf.mxu0
    %v2278 = vadd.f32 0.0, %v2277
    %v2279 = vpop.f32.mrf.mxu0
    %2280 = vdwg.mxu0
    %2281 = vmatpush.bf16.msra.mxu0 %v2230
    %2282 = vmatpush.bf16.msra.mxu0 %v2227
    %2283 = vmatpush.bf16.msra.mxu0 %v2224
    %2284 = vmatpush.bf16.msra.mxu0 %v2221
    %2285 = vmatpush.bf16.msra.mxu0 %v2218
    %2286 = vmatpush.bf16.msra.mxu0 %v2215
    %2287 = vmatpush.bf16.msra.mxu0 %v2212
    %2288 = vmatpush.bf16.msra.mxu0 %v2209
    %2289 = vmatmul.bf16.gmra.mxu0 %v2125
    %v2290 = vpop.f32.mrf.mxu0
    %v2291 = vadd.f32 0.0, %v2290
    %v2292 = vpop.f32.mrf.mxu0
    %2293 = vdwg.mxu0
    %v2294 = vadd.f32 %v2075, %v2265
    %v2295 = vadd.f32 %v2076, %v2278
    %v2296 = vadd.f32 %v2077, %v2291
    %s2297 = scalar_lea.vmem [#allocation7], 1728
    %v2298 = vld [vmem:[%s2297] sm:$0xff]
    %v2299 = vld [vmem:[%s2297 + $0x8] sm:$0xf]
    %v2300 = vld [vmem:[%s2297 + $0xc] sm:$0xff]
    %v2301 = vld [vmem:[%s2297 + $0x14] sm:$0xf]
    %v2302 = vld [vmem:[%s2297 + $0x18] sm:$0xff]
    %v2303 = vld [vmem:[%s2297 + $0x20] sm:$0xf]
    %v2304 = vld [vmem:[%s2297 + $0x24] sm:$0xff]
    %v2305 = vld [vmem:[%s2297 + $0x2c] sm:$0xf]
    %v2306 = vld [vmem:[%s2297 + $0x30] sm:$0xff]
    %v2307 = vld [vmem:[%s2297 + $0x38] sm:$0xf]
    %v2308 = vld [vmem:[%s2297 + $0x3c] sm:$0xff]
    %v2309 = vld [vmem:[%s2297 + $0x44] sm:$0xf]
    %v2310 = vld [vmem:[%s2297 + $0x48] sm:$0xff]
    %v2311 = vld [vmem:[%s2297 + $0x50] sm:$0xf]
    %v2312 = vld [vmem:[%s2297 + $0x54] sm:$0xff]
    %v2313 = vld [vmem:[%s2297 + $0x5c] sm:$0xf]
    %v2314 = vld [vmem:[%s2297 + $0x60] sm:$0xff]
    %v2315 = vld [vmem:[%s2297 + $0x68] sm:$0xf]
    %v2316 = vld [vmem:[%s2297 + $0x6c] sm:$0xff]
    %v2317 = vld [vmem:[%s2297 + $0x74] sm:$0xf]
    %v2318 = vld [vmem:[%s2297 + $0x78] sm:$0xff]
    %v2319 = vld [vmem:[%s2297 + $0x80] sm:$0xf]
    %v2320 = vld [vmem:[%s2297 + $0x84] sm:$0xff]
    %v2321 = vld [vmem:[%s2297 + $0x8c] sm:$0xf]
    %v2322 = vld [vmem:[%s2297 + $0x90] sm:$0xff]
    %v2323 = vld [vmem:[%s2297 + $0x98] sm:$0xf]
    %v2324 = vld [vmem:[%s2297 + $0x9c] sm:$0xff]
    %v2325 = vld [vmem:[%s2297 + $0xa4] sm:$0xf]
    %v2326 = vld [vmem:[%s2297 + $0xa8] sm:$0xff]
    %v2327 = vld [vmem:[%s2297 + $0xb0] sm:$0xf]
    %v2328 = vld [vmem:[%s2297 + $0xb4] sm:$0xff]
    %v2329 = vld [vmem:[%s2297 + $0xbc] sm:$0xf]
    %v2330 = vrot.slane %v1008, 6
    %v2331 = vrot.slane %v1009, 5
    %v2332 = vsel %vm325, %v2331, %v2330
    %v2333 = vrot.slane %v1010, 4
    %v2334 = vsel %vm327, %v2333, %v2332
    %v2335 = vrot.slane %v1011, 3
    %v2336 = vsel %vm329, %v2335, %v2334
    %v2337 = vrot.slane %v1012, 2
    %v2338 = vsel %vm331, %v2337, %v2336
    %v2339 = vrot.slane %v1013, 1
    %v2340 = vsel %vm333, %v2339, %v2338
    %v2341 = vsel %vm335, %v1014, %v2340
    %v2342 = vrot.slane %v1015, 7
    %v2343 = vsel %vm337, %v2342, %v2341
    %v2344 = vpack.c.b16 %v2343, %v2343
    %v2378 = vunpack.c.l.b16 %v2298
    %v2379 = vunpack.c.h.b16 %v2298
    %v2380 = vunpack.c.l.b16 %v2299
    %v2381 = vunpack.c.l.b16 %v2300
    %v2382 = vunpack.c.h.b16 %v2300
    %v2383 = vunpack.c.l.b16 %v2301
    %v2384 = vunpack.c.l.b16 %v2302
    %v2385 = vunpack.c.h.b16 %v2302
    %v2386 = vunpack.c.l.b16 %v2303
    %v2387 = vunpack.c.l.b16 %v2304
    %v2388 = vunpack.c.h.b16 %v2304
    %v2389 = vunpack.c.l.b16 %v2305
    %v2390 = vunpack.c.l.b16 %v2306
    %v2391 = vunpack.c.h.b16 %v2306
    %v2392 = vunpack.c.l.b16 %v2307
    %v2393 = vunpack.c.l.b16 %v2308
    %v2394 = vunpack.c.h.b16 %v2308
    %v2395 = vunpack.c.l.b16 %v2309
    %v2396 = vunpack.c.l.b16 %v2310
    %v2397 = vunpack.c.h.b16 %v2310
    %v2398 = vunpack.c.l.b16 %v2311
    %v2399 = vunpack.c.l.b16 %v2312
    %v2400 = vunpack.c.h.b16 %v2312
    %v2401 = vunpack.c.l.b16 %v2313
    %v2402 = vunpack.c.l.b16 %v2314
    %v2403 = vunpack.c.h.b16 %v2314
    %v2404 = vunpack.c.l.b16 %v2315
    %v2405 = vunpack.c.l.b16 %v2316
    %v2406 = vunpack.c.h.b16 %v2316
    %v2407 = vunpack.c.l.b16 %v2317
    %v2408 = vunpack.c.l.b16 %v2318
    %v2409 = vunpack.c.h.b16 %v2318
    %v2410 = vunpack.c.l.b16 %v2319
    %v2411 = vunpack.c.l.b16 %v2320
    %v2412 = vunpack.c.h.b16 %v2320
    %v2413 = vunpack.c.l.b16 %v2321
    %v2414 = vunpack.c.l.b16 %v2322
    %v2415 = vunpack.c.h.b16 %v2322
    %v2416 = vunpack.c.l.b16 %v2323
    %v2417 = vunpack.c.l.b16 %v2324
    %v2418 = vunpack.c.h.b16 %v2324
    %v2419 = vunpack.c.l.b16 %v2325
    %v2420 = vunpack.c.l.b16 %v2326
    %v2421 = vunpack.c.h.b16 %v2326
    %v2422 = vunpack.c.l.b16 %v2327
    %v2423 = vunpack.c.l.b16 %v2328
    %v2424 = vunpack.c.h.b16 %v2328
    %v2425 = vunpack.c.l.b16 %v2329
    %v2426 = vpack.c.b16 %v2381, %v2378
    %v2427 = vpack.c.b16 %v2382, %v2379
    %v2428 = vpack.c.b16 %v2383, %v2380
    %v2429 = vpack.c.b16 %v2387, %v2384
    %v2430 = vpack.c.b16 %v2388, %v2385
    %v2431 = vpack.c.b16 %v2389, %v2386
    %v2432 = vpack.c.b16 %v2393, %v2390
    %v2433 = vpack.c.b16 %v2394, %v2391
    %v2434 = vpack.c.b16 %v2395, %v2392
    %v2435 = vpack.c.b16 %v2399, %v2396
    %v2436 = vpack.c.b16 %v2400, %v2397
    %v2437 = vpack.c.b16 %v2401, %v2398
    %v2438 = vpack.c.b16 %v2405, %v2402
    %v2439 = vpack.c.b16 %v2406, %v2403
    %v2440 = vpack.c.b16 %v2407, %v2404
    %v2441 = vpack.c.b16 %v2411, %v2408
    %v2442 = vpack.c.b16 %v2412, %v2409
    %v2443 = vpack.c.b16 %v2413, %v2410
    %v2444 = vpack.c.b16 %v2417, %v2414
    %v2445 = vpack.c.b16 %v2418, %v2415
    %v2446 = vpack.c.b16 %v2419, %v2416
    %v2447 = vpack.c.b16 %v2423, %v2420
    %v2448 = vpack.c.b16 %v2424, %v2421
    %v2449 = vpack.c.b16 %v2425, %v2422
    %2474 = vmatpush.bf16.msra.mxu0 %v2447
    %2475 = vmatpush.bf16.msra.mxu0 %v2444
    %2476 = vmatpush.bf16.msra.mxu0 %v2441
    %2477 = vmatpush.bf16.msra.mxu0 %v2438
    %2478 = vmatpush.bf16.msra.mxu0 %v2435
    %2479 = vmatpush.bf16.msra.mxu0 %v2432
    %2480 = vmatpush.bf16.msra.mxu0 %v2429
    %2481 = vmatpush.bf16.msra.mxu0 %v2426
    %2482 = vmatmul.bf16.gmra.mxu0 %v2344
    %v2483 = vpop.f32.mrf.mxu0
    %v2484 = vadd.f32 0.0, %v2483
    %v2485 = vpop.f32.mrf.mxu0
    %2486 = vdwg.mxu0
    %2487 = vmatpush.bf16.msra.mxu0 %v2448
    %2488 = vmatpush.bf16.msra.mxu0 %v2445
    %2489 = vmatpush.bf16.msra.mxu0 %v2442
    %2490 = vmatpush.bf16.msra.mxu0 %v2439
    %2491 = vmatpush.bf16.msra.mxu0 %v2436
    %2492 = vmatpush.bf16.msra.mxu0 %v2433
    %2493 = vmatpush.bf16.msra.mxu0 %v2430
    %2494 = vmatpush.bf16.msra.mxu0 %v2427
    %2495 = vmatmul.bf16.gmra.mxu0 %v2344
    %v2496 = vpop.f32.mrf.mxu0
    %v2497 = vadd.f32 0.0, %v2496
    %v2498 = vpop.f32.mrf.mxu0
    %2499 = vdwg.mxu0
    %2500 = vmatpush.bf16.msra.mxu0 %v2449
    %2501 = vmatpush.bf16.msra.mxu0 %v2446
    %2502 = vmatpush.bf16.msra.mxu0 %v2443
    %2503 = vmatpush.bf16.msra.mxu0 %v2440
    %2504 = vmatpush.bf16.msra.mxu0 %v2437
    %2505 = vmatpush.bf16.msra.mxu0 %v2434
    %2506 = vmatpush.bf16.msra.mxu0 %v2431
    %2507 = vmatpush.bf16.msra.mxu0 %v2428
    %2508 = vmatmul.bf16.gmra.mxu0 %v2344
    %v2509 = vpop.f32.mrf.mxu0
    %v2510 = vadd.f32 0.0, %v2509
    %v2511 = vpop.f32.mrf.mxu0
    %2512 = vdwg.mxu0
    %v2513 = vadd.f32 %v2294, %v2484
    %v2514 = vadd.f32 %v2295, %v2497
    %v2515 = vadd.f32 %v2296, %v2510
    %v2516 = vld [vmem:[#allocation8] sm:$0x7]
    %v2518 = vperm.slane %v2516, 0
    %v2519 = vperm.slane %v2516, 1
    %v2520 = vperm.slane %v2516, 2
    %v2524 = vadd.f32 %v2513, %v2518
    %v2525 = vadd.f32 %v2514, %v2519
    %v2526 = vadd.f32 %v2515, %v2520
    %v2527 = vmax.f32 %v2524, 0.0
    %v2528 = vmax.f32 %v2525, 0.0
    %v2529 = vpack.c.bf16 %v2527, %v2527
    %v2530 = vpack.c.bf16 %v2528, %v2528
    %v2531 = vld [vmem:[#allocation10] sm:$0xf]
    %v2532 = vld [vmem:[#allocation10 + $0x4] sm:$0xf]
    %v2533 = vld [vmem:[#allocation10 + $0x8] sm:$0xf]
    %v2534 = vld [vmem:[#allocation10 + $0xc] sm:$0xf]
    %v2535 = vld [vmem:[#allocation10 + $0x10] sm:$0xf]
    %v2536 = vld [vmem:[#allocation10 + $0x14] sm:$0xf]
    %v2537 = vld [vmem:[#allocation10 + $0x18] sm:$0xf]
    %v2538 = vld [vmem:[#allocation10 + $0x1c] sm:$0xf]
    %v2539 = vld [vmem:[#allocation10 + $0x20] sm:$0xf]
    %v2540 = vld [vmem:[#allocation10 + $0x24] sm:$0xf]
    %v2541 = vld [vmem:[#allocation10 + $0x28] sm:$0xf]
    %v2542 = vld [vmem:[#allocation10 + $0x2c] sm:$0xf]
    %v2543 = vld [vmem:[#allocation10 + $0x30] sm:$0xf]
    %v2544 = vld [vmem:[#allocation10 + $0x34] sm:$0xf]
    %v2545 = vld [vmem:[#allocation10 + $0x38] sm:$0xf]
    %v2546 = vld [vmem:[#allocation10 + $0x3c] sm:$0xf]
    %v2547 = vld [vmem:[#allocation10 + $0x40] sm:$0xf]
    %v2548 = vld [vmem:[#allocation10 + $0x44] sm:$0xf]
    %v2549 = vld [vmem:[#allocation10 + $0x48] sm:$0xf]
    %v2550 = vld [vmem:[#allocation10 + $0x4c] sm:$0xf]
    %v2551 = vld [vmem:[#allocation10 + $0x50] sm:$0xf]
    %v2552 = vld [vmem:[#allocation10 + $0x54] sm:$0xf]
    %v2553 = vld [vmem:[#allocation10 + $0x58] sm:$0xf]
    %v2554 = vld [vmem:[#allocation10 + $0x5c] sm:$0xf]
    %v2555 = vld [vmem:[#allocation10 + $0x60] sm:$0xf]
    %v2556 = vld [vmem:[#allocation10 + $0x64] sm:$0xf]
    %v2557 = vld [vmem:[#allocation10 + $0x68] sm:$0xf]
    %v2558 = vld [vmem:[#allocation10 + $0x6c] sm:$0xf]
    %v2559 = vld [vmem:[#allocation10 + $0x70] sm:$0xf]
    %v2560 = vld [vmem:[#allocation10 + $0x74] sm:$0xf]
    %v2561 = vld [vmem:[#allocation10 + $0x78] sm:$0xf]
    %v2562 = vld [vmem:[#allocation10 + $0x7c] sm:$0xf]
    %v2563 = vld [vmem:[%s5] sm:$0x1]
    %v2565 = vperm.slane %v2563, 0
    %v2599 = vunpack.c.l.b16 %v2531
    %v2600 = vunpack.c.l.b16 %v2532
    %v2601 = vunpack.c.l.b16 %v2533
    %v2602 = vunpack.c.l.b16 %v2534
    %v2603 = vunpack.c.l.b16 %v2535
    %v2604 = vunpack.c.l.b16 %v2536
    %v2605 = vunpack.c.l.b16 %v2537
    %v2606 = vunpack.c.l.b16 %v2538
    %v2607 = vunpack.c.l.b16 %v2539
    %v2608 = vunpack.c.l.b16 %v2540
    %v2609 = vunpack.c.l.b16 %v2541
    %v2610 = vunpack.c.l.b16 %v2542
    %v2611 = vunpack.c.l.b16 %v2543
    %v2612 = vunpack.c.l.b16 %v2544
    %v2613 = vunpack.c.l.b16 %v2545
    %v2614 = vunpack.c.l.b16 %v2546
    %v2615 = vunpack.c.l.b16 %v2547
    %v2616 = vunpack.c.l.b16 %v2548
    %v2617 = vunpack.c.l.b16 %v2549
    %v2618 = vunpack.c.l.b16 %v2550
    %v2619 = vunpack.c.l.b16 %v2551
    %v2620 = vunpack.c.l.b16 %v2552
    %v2621 = vunpack.c.l.b16 %v2553
    %v2622 = vunpack.c.l.b16 %v2554
    %v2623 = vunpack.c.l.b16 %v2555
    %v2624 = vunpack.c.l.b16 %v2556
    %v2625 = vunpack.c.l.b16 %v2557
    %v2626 = vunpack.c.l.b16 %v2558
    %v2627 = vunpack.c.l.b16 %v2559
    %v2628 = vunpack.c.l.b16 %v2560
    %v2629 = vunpack.c.l.b16 %v2561
    %v2630 = vunpack.c.l.b16 %v2562
    %v2631 = vpack.c.b16 %v2600, %v2599
    %v2632 = vpack.c.b16 %v2602, %v2601
    %v2633 = vpack.c.b16 %v2604, %v2603
    %v2634 = vpack.c.b16 %v2606, %v2605
    %v2635 = vpack.c.b16 %v2608, %v2607
    %v2636 = vpack.c.b16 %v2610, %v2609
    %v2637 = vpack.c.b16 %v2612, %v2611
    %v2638 = vpack.c.b16 %v2614, %v2613
    %v2639 = vpack.c.b16 %v2616, %v2615
    %v2640 = vpack.c.b16 %v2618, %v2617
    %v2641 = vpack.c.b16 %v2620, %v2619
    %v2642 = vpack.c.b16 %v2622, %v2621
    %v2643 = vpack.c.b16 %v2624, %v2623
    %v2644 = vpack.c.b16 %v2626, %v2625
    %v2645 = vpack.c.b16 %v2628, %v2627
    %v2646 = vpack.c.b16 %v2630, %v2629
    %2663 = vmatpush.bf16.msra.mxu0 %v2638
    %2664 = vmatpush.bf16.msra.mxu0 %v2637
    %2665 = vmatpush.bf16.msra.mxu0 %v2636
    %2666 = vmatpush.bf16.msra.mxu0 %v2635
    %2667 = vmatpush.bf16.msra.mxu0 %v2634
    %2668 = vmatpush.bf16.msra.mxu0 %v2633
    %2669 = vmatpush.bf16.msra.mxu0 %v2632
    %2670 = vmatpush.bf16.msra.mxu0 %v2631
    %2671 = vmatmul.bf16.gmra.mxu0 %v2529
    %v2672 = vpop.f32.mrf.mxu0
    %v2673 = vadd.f32 %v2565, %v2672
    %v2674 = vpop.f32.mrf.mxu0
    %2675 = vdwg.mxu0
    %2676 = vmatpush.bf16.msra.mxu0 %v2646
    %2677 = vmatpush.bf16.msra.mxu0 %v2645
    %2678 = vmatpush.bf16.msra.mxu0 %v2644
    %2679 = vmatpush.bf16.msra.mxu0 %v2643
    %2680 = vmatpush.bf16.msra.mxu0 %v2642
    %2681 = vmatpush.bf16.msra.mxu0 %v2641
    %2682 = vmatpush.bf16.msra.mxu0 %v2640
    %2683 = vmatpush.bf16.msra.mxu0 %v2639
    %2684 = vmatmul.bf16.gmra.mxu0 %v2530
    %v2685 = vpop.f32.mrf.mxu0
    %v2686 = vadd.f32 %v2673, %v2685
    %v2687 = vpop.f32.mrf.mxu0
    %2688 = vdwg.mxu0
    %v2689 = vadd.f32 %v2686, %v2526
    %v2690 = vmax.f32 %v2689, 0.0
    %2691 = vst [vmem:[#allocation11] sm:$0xff] %v2690
    // Predicated region
    $region46: #{tpu_custom_call.1} parent=1 // pred_check
      _
    $region47: #{tpu_custom_call.1} parent=1 // pred_check_branch
      %2693 = sbr.rel (0) target = $region49
    $region48: #{tpu_custom_call.1} parent=1 // pred_region
      %2695 = vsyncadd [#allocation4], 0
      %s2697 = sshll.u32 [#allocation11], 4
      %s2698 = int_to_ptr.vmem [resolvable:$true] %s2697
      %s2699 = sshll.u32 %s6, 4
      %s2700 = int_to_ptr.hbm [resolvable:$true] %s2699
      %2702 = dma.vmem_to_hbm [thread:$0]  %s2698, 128, %s2700, [#allocation4]
    $region49: #{tpu_custom_call.1} parent=1 // pred_fallthru
      _
    // Predicated region
    $region50: #{tpu_custom_call.1} parent=1 // pred_check
      _
    $region51: #{tpu_custom_call.1} parent=1 // pred_check_branch
      %2704 = sbr.rel (0) target = $region53
    $region52: #{tpu_custom_call.1} parent=1 // pred_region
      %2706 = dma.done [#allocation4], 128
    $region53: #{tpu_custom_call.1} parent=1 // pred_fallthru
      _
    %2707 = vsyncpa [#allocation3], 1
    %2708 = vsyncpa [#allocation6], 1
    %2709 = vsyncpa [#allocation9], 1
    %2710 = vsyncpa [#allocation4], 1

</llo_original>
